<compile_context>
chip_gen: v5e
topology: v5e:2x2
jax: 0.10.0
libtpu: 0.0.40
codegen_flags: <defaults>
</compile_context>

<pallas_src>
import functools

import jax
import jax.numpy as jnp
from jax import lax
from jax.experimental import pallas as pl
from jax.experimental.pallas import tpu as pltpu  # noqa: F401  (kept for parity)


# ----------------------------- Pallas kernel --------------------------------

def _generator_kernel(x_ref,        # (B*T, N)   batch-major flattened input
                      enc_w_ref,    # (N, E)
                      enc_b_ref,    # (1, E)
                      w_ih1_ref,    # (E, 4H)    gate order (i, f, o, g)
                      b1_ref,       # (1, 4H)    gate order (i, f, o, g)
                      w_fused_ref,  # (2H, 8H)   [ [Wih2;Whh2] | [Whh1;0] ]
                      b2_ref,       # (1, 4H)    gate order (i, f, o, g)
                      dec_w_ref,    # (T*H, T*D) block-diag kron(I_T, Wdec)
                      dec_b_ref,    # (1, T*D)   tiled decoder bias
                      y_ref,        # (B, T*D)   output, lane-dense
                      *, T, B):
    H = b2_ref.shape[1] // 4

    # ---- hoisted, batched over all B*T rows: encoder + layer-1 input proj ----
    x = x_ref[...].astype(jnp.float32)                               # (B*T, N)
    e = jnp.dot(x, enc_w_ref[...], preferred_element_type=jnp.float32)
    e = jnp.maximum(e + enc_b_ref[...], 0.0)                         # (B*T, E)
    gp1 = (jnp.dot(e, w_ih1_ref[...], preferred_element_type=jnp.float32)
           + b1_ref[...])                                            # (B*T, 4H)

    w_fused = w_fused_ref[...]                                       # (2H, 8H)
    b2 = b2_ref[...]                                                 # (1, 4H)

    def gate_math(gates, c):
        # gate columns: [i | f | o | g], each H wide (permuted host-side)
        sig = jax.nn.sigmoid(gates[:, :3 * H])      # one EUP pass (3H lanes)
        g = jnp.tanh(gates[:, 3 * H:])              # one EUP pass (H lanes)
        i = sig[:, 0 * H:1 * H]
        f = sig[:, 1 * H:2 * H]
        o = sig[:, 2 * H:3 * H]
        c_new = f * c + i * g
        h_new = o * jnp.tanh(c_new)
        return h_new, c_new

    def pick_rows(mat, t):
        # batch-major rows b*T + t for every batch b (static sublane slices)
        return jnp.concatenate(
            [mat[b * T + t: b * T + t + 1, :] for b in range(B)], axis=0)

    zeros_h = jnp.zeros((B, H), jnp.float32)
    zeros_g = jnp.zeros((B, 4 * H), jnp.float32)
    h2, c1, c2 = zeros_h, zeros_h, zeros_h
    rec1 = zeros_g            # h1_{t-1} @ Whh1 (zero at t=0)
    h2_cols = []

    # ---- recurrent loop: ONE MXU dot per timestep ----
    for t in range(T):
        g1 = pick_rows(gp1, t) + rec1                                # (B, 4H)
        h1, c1 = gate_math(g1, c1)

        z = jnp.concatenate([h1, h2], axis=1)                        # (B, 2H)
        fused = jnp.dot(z, w_fused, preferred_element_type=jnp.float32)  # (B, 8H)
        rec1 = fused[:, 4 * H:]                # layer-1 recurrent term for t+1
        h2, c2 = gate_math(fused[:, :4 * H] + b2, c2)                # layer 2
        h2_cols.append(h2)

    # ---- hoisted block-diag decoder over all T hidden states, single store ----
    hcat = jnp.concatenate(h2_cols, axis=1)                          # (B, T*H)
    y = jnp.dot(hcat, dec_w_ref[...], preferred_element_type=jnp.float32)
    y = jax.nn.sigmoid(y + dec_b_ref[...])                           # (B, T*D)
    y_ref[...] = y.astype(y_ref.dtype)


# --------------------------- one-time weight prep -----------------------------

def prepare_params(params, *, historical_len):
    """One-time weight permutation / fusion. Call once, outside the jit path."""
    H = params["w_hh1"].shape[0]
    T = historical_len

    def perm(w):  # PyTorch gate order (i, f, g, o) -> kernel order (i, f, o, g)
        return jnp.concatenate(
            [w[..., 0 * H:1 * H], w[..., 1 * H:2 * H],
             w[..., 3 * H:4 * H], w[..., 2 * H:3 * H]], axis=-1)

    w2 = jnp.concatenate([perm(params["w_ih2"]),
                          perm(params["w_hh2"])], axis=0)            # (2H, 4H)
    w1rec = jnp.concatenate([perm(params["w_hh1"]),
                             jnp.zeros((H, 4 * H), jnp.float32)], axis=0)  # (2H, 4H)
    w_fused = jnp.concatenate([w2, w1rec], axis=1)                   # (2H, 8H)

    dec_w_blk = jnp.kron(jnp.eye(T, dtype=jnp.float32), params["dec_w"])  # (T*H, T*D)
    dec_b_blk = jnp.tile(params["dec_b"], (1, T))                         # (1, T*D)

    return {
        "enc_w": params["enc_w"], "enc_b": params["enc_b"],
        "w_ih1": perm(params["w_ih1"]), "b1": perm(params["b1"]),
        "w_fused": w_fused, "b2": perm(params["b2"]),
        "dec_w_blk": dec_w_blk, "dec_b_blk": dec_b_blk,
    }


# ------------------------------- wrapper -------------------------------------

def generator_batch_forward(inputs, prepared, *, historical_len, num_nodes):
    """Forward pass matching Generator_batch.forward.

    inputs: any array reshapeable to (-1, historical_len, num_nodes), float32.
    prepared: output of prepare_params().
    returns: (B, historical_len, 1, num_nodes) float32.
    """
    x = jnp.reshape(inputs, (-1, historical_len, num_nodes)).astype(jnp.float32)
    B, T, N = x.shape
    D = prepared["dec_b_blk"].shape[1] // T

    x_bm = jnp.reshape(x, (B * T, N))            # batch-major; free reshape

    kernel = functools.partial(_generator_kernel, T=T, B=B)
    y = pl.pallas_call(
        kernel,
        out_shape=jax.ShapeDtypeStruct((B, T * D), jnp.float32),
    )(x_bm,
      prepared["enc_w"], prepared["enc_b"],
      prepared["w_ih1"], prepared["b1"],
      prepared["w_fused"], prepared["b2"],
      prepared["dec_w_blk"], prepared["dec_b_blk"])

    return jnp.reshape(y, (-1, historical_len, 1, num_nodes))   # free reshape


# ----------------------- pure-JAX reference (for check) ----------------------

def _reference_forward(inputs, params, *, historical_len, num_nodes):
    x = jnp.reshape(inputs, (-1, historical_len, num_nodes)).astype(jnp.float32)
    H = params["w_hh1"].shape[0]
    e = jax.nn.relu(x @ params["enc_w"] + params["enc_b"][0])   # (B, T, E)

    def cell(carry, inp, w_ih, w_hh, b):
        h, c = carry
        g = inp @ w_ih + h @ w_hh + b[0]
        i = jax.nn.sigmoid(g[:, 0 * H:1 * H])
        f = jax.nn.sigmoid(g[:, 1 * H:2 * H])
        gg = jnp.tanh(g[:, 2 * H:3 * H])
        o = jax.nn.sigmoid(g[:, 3 * H:4 * H])
        c = f * c + i * gg
        h = o * jnp.tanh(c)
        return (h, c), h

    B = x.shape[0]

    def step(carry, xt):
        (h1, c1, h2, c2) = carry
        (h1, c1), y1 = cell((h1, c1), xt, params["w_ih1"], params["w_hh1"], params["b1"])
        (h2, c2), y2 = cell((h2, c2), y1, params["w_ih2"], params["w_hh2"], params["b2"])
        return (h1, c1, h2, c2), y2

    init = tuple(jnp.zeros((B, H), jnp.float32) for _ in range(4))
    _, ys = lax.scan(step, init, jnp.transpose(e, (1, 0, 2)))   # (T, B, H)
    ys = jnp.transpose(ys, (1, 0, 2))
    out = jax.nn.sigmoid(ys @ params["dec_w"] + params["dec_b"][0])
    return jnp.reshape(out, (-1, historical_len, 1, num_nodes))


# --------------------------------- main ---------------------------------------

def _make_params(key, num_nodes, encoder_units, lstm_units, decoder_units):
    E = encoder_units[0]
    H = lstm_units[0]
    D = decoder_units[0]
    N = num_nodes
    ks = jax.random.split(key, 11)
    s = 0.1
    return {
        "enc_w": s * jax.random.normal(ks[0], (N, E), jnp.float32),
        "enc_b": s * jax.random.normal(ks[1], (1, E), jnp.float32),
        "w_ih1": s * jax.random.normal(ks[2], (E, 4 * H), jnp.float32),
        "w_hh1": s * jax.random.normal(ks[3], (H, 4 * H), jnp.float32),
        "b1":    s * jax.random.normal(ks[4], (1, 4 * H), jnp.float32),
        "w_ih2": s * jax.random.normal(ks[5], (H, 4 * H), jnp.float32),
        "w_hh2": s * jax.random.normal(ks[6], (H, 4 * H), jnp.float32),
        "b2":    s * jax.random.normal(ks[7], (1, 4 * H), jnp.float32),
        "dec_w": s * jax.random.normal(ks[8], (H, D), jnp.float32),
        "dec_b": s * jax.random.normal(ks[9], (1, D), jnp.float32),
    }


if __name__ == "__main__":
    # Module hyper-parameters (decoder_units[0] must equal num_nodes for the
    # final .view(-1, T, 1, num_nodes) to be valid, as in the PyTorch model).
    num_nodes = 16
    historical_len = 8
    encoder_units = [32]
    lstm_units = [32]
    decoder_units = [num_nodes]
    batch = 2

    key = jax.random.PRNGKey(0)
    kx, kp = jax.random.split(key)
    inputs = jax.random.normal(kx, (batch, historical_len, num_nodes), jnp.float32)
    params = _make_params(kp, num_nodes, encoder_units, lstm_units, decoder_units)

    # One-time weight permutation / fusion, outside the per-call jit path.
    prepared = prepare_params(params, historical_len=historical_len)
    prepared = jax.tree_util.tree_map(jax.block_until_ready, prepared)

    fwd = jax.jit(functools.partial(generator_batch_forward,
                                    historical_len=historical_len,
                                    num_nodes=num_nodes))
    out = fwd(inputs, prepared)
    out = jax.block_until_ready(out)

    ref = _reference_forward(inputs, params,
                             historical_len=historical_len, num_nodes=num_nodes)
    assert out.shape == (batch, historical_len, 1, num_nodes), out.shape
    assert jnp.allclose(out, ref, atol=1e-5, rtol=1e-5), \
        float(jnp.max(jnp.abs(out - ref)))

    print("KERNEL_OK")
</pallas_src>

<mosaic_0001>
module attributes {stable_mosaic.version = 11 : i64} {
  func.func @_generator_kernel(%arg0: memref<16x16xf32, #tpu.memory_space<vmem>>, %arg1: memref<16x32xf32, #tpu.memory_space<vmem>>, %arg2: memref<1x32xf32, #tpu.memory_space<vmem>>, %arg3: memref<32x128xf32, #tpu.memory_space<vmem>>, %arg4: memref<1x128xf32, #tpu.memory_space<vmem>>, %arg5: memref<64x256xf32, #tpu.memory_space<vmem>>, %arg6: memref<1x128xf32, #tpu.memory_space<vmem>>, %arg7: memref<256x128xf32, #tpu.memory_space<vmem>>, %arg8: memref<1x128xf32, #tpu.memory_space<vmem>>, %arg9: memref<2x128xf32, #tpu.memory_space<vmem>>) attributes {dimension_semantics = [], scalar_prefetch = 0 : i64, scratch_operands = 0 : i64, tpu.core_type = #tpu.core_type<tc>} {
    %c0 = arith.constant 0 : index
    %c0_0 = arith.constant 0 : index
    %0 = vector.load %arg0[%c0, %c0_0] : memref<16x16xf32, #tpu.memory_space<vmem>>, vector<16x16xf32>
    %c0_1 = arith.constant 0 : index
    %c0_2 = arith.constant 0 : index
    %1 = vector.load %arg1[%c0_1, %c0_2] : memref<16x32xf32, #tpu.memory_space<vmem>>, vector<16x32xf32>
    %cst = arith.constant dense<0.000000e+00> : vector<16x32xf32>
    %2 = tpu.matmul %0, %1, %cst {dimension_numbers = #tpu.dot_dimension_numbers<[1], [0], [0], [1], [0, 0, 1, 1], [], []>} : vector<16x16xf32>, vector<16x32xf32>, vector<16x32xf32> -> vector<16x32xf32>
    %c0_3 = arith.constant 0 : index
    %c0_4 = arith.constant 0 : index
    %3 = vector.load %arg2[%c0_3, %c0_4] : memref<1x32xf32, #tpu.memory_space<vmem>>, vector<1x32xf32>
    %4 = vector.broadcast %3 : vector<1x32xf32> to vector<16x32xf32>
    %5 = arith.addf %2, %4 : vector<16x32xf32>
    %cst_5 = arith.constant 0.000000e+00 : f32
    %6 = vector.broadcast %cst_5 : f32 to vector<16x32xf32>
    %7 = arith.maximumf %5, %6 : vector<16x32xf32>
    %c0_6 = arith.constant 0 : index
    %c0_7 = arith.constant 0 : index
    %8 = vector.load %arg3[%c0_6, %c0_7] : memref<32x128xf32, #tpu.memory_space<vmem>>, vector<32x128xf32>
    %cst_8 = arith.constant dense<0.000000e+00> : vector<16x128xf32>
    %9 = tpu.matmul %7, %8, %cst_8 {dimension_numbers = #tpu.dot_dimension_numbers<[1], [0], [0], [1], [0, 0, 1, 1], [], []>} : vector<16x32xf32>, vector<32x128xf32>, vector<16x128xf32> -> vector<16x128xf32>
    %c0_9 = arith.constant 0 : index
    %c0_10 = arith.constant 0 : index
    %10 = vector.load %arg4[%c0_9, %c0_10] : memref<1x128xf32, #tpu.memory_space<vmem>>, vector<1x128xf32>
    %11 = vector.broadcast %10 : vector<1x128xf32> to vector<16x128xf32>
    %12 = arith.addf %9, %11 : vector<16x128xf32>
    %c0_11 = arith.constant 0 : index
    %c0_12 = arith.constant 0 : index
    %13 = vector.load %arg5[%c0_11, %c0_12] : memref<64x256xf32, #tpu.memory_space<vmem>>, vector<64x256xf32>
    %c0_13 = arith.constant 0 : index
    %c0_14 = arith.constant 0 : index
    %14 = vector.load %arg6[%c0_13, %c0_14] : memref<1x128xf32, #tpu.memory_space<vmem>>, vector<1x128xf32>
    %cst_15 = arith.constant 0.000000e+00 : f32
    %15 = vector.broadcast %cst_15 : f32 to vector<2x32xf32>
    %cst_16 = arith.constant 0.000000e+00 : f32
    %16 = vector.broadcast %cst_16 : f32 to vector<2x128xf32>
    %17 = vector.extract_strided_slice %12 {offsets = [0, 0], sizes = [1, 128], strides = [1, 1]} : vector<16x128xf32> to vector<1x128xf32>
    %18 = vector.extract_strided_slice %12 {offsets = [8, 0], sizes = [1, 128], strides = [1, 1]} : vector<16x128xf32> to vector<1x128xf32>
    %19 = tpu.concatenate %17, %18 in 0 : vector<1x128xf32>, vector<1x128xf32> -> vector<2x128xf32>
    %20 = arith.addf %19, %16 : vector<2x128xf32>
    %21 = vector.extract_strided_slice %20 {offsets = [0, 0], sizes = [2, 96], strides = [1, 1]} : vector<2x128xf32> to vector<2x96xf32>
    %22 = arith.negf %21 : vector<2x96xf32>
    %23 = math.exp %22 : vector<2x96xf32>
    %cst_17 = arith.constant 1.000000e+00 : f32
    %24 = vector.broadcast %cst_17 : f32 to vector<2x96xf32>
    %25 = arith.addf %24, %23 : vector<2x96xf32>
    %26 = arith.divf %24, %25 : vector<2x96xf32>
    %27 = vector.extract_strided_slice %20 {offsets = [0, 96], sizes = [2, 32], strides = [1, 1]} : vector<2x128xf32> to vector<2x32xf32>
    %28 = math.tanh %27 : vector<2x32xf32>
    %29 = vector.extract_strided_slice %26 {offsets = [0, 0], sizes = [2, 32], strides = [1, 1]} : vector<2x96xf32> to vector<2x32xf32>
    %30 = vector.extract_strided_slice %26 {offsets = [0, 32], sizes = [2, 32], strides = [1, 1]} : vector<2x96xf32> to vector<2x32xf32>
    %31 = vector.extract_strided_slice %26 {offsets = [0, 64], sizes = [2, 32], strides = [1, 1]} : vector<2x96xf32> to vector<2x32xf32>
    %32 = arith.mulf %30, %15 : vector<2x32xf32>
    %33 = arith.mulf %29, %28 : vector<2x32xf32>
    %34 = arith.addf %32, %33 : vector<2x32xf32>
    %35 = math.tanh %34 : vector<2x32xf32>
    %36 = arith.mulf %31, %35 : vector<2x32xf32>
    %37 = tpu.concatenate %36, %15 in 1 : vector<2x32xf32>, vector<2x32xf32> -> vector<2x64xf32>
    %cst_18 = arith.constant dense<0.000000e+00> : vector<2x256xf32>
    %38 = tpu.matmul %37, %13, %cst_18 {dimension_numbers = #tpu.dot_dimension_numbers<[1], [0], [0], [1], [0, 0, 1, 1], [], []>} : vector<2x64xf32>, vector<64x256xf32>, vector<2x256xf32> -> vector<2x256xf32>
    %39 = vector.extract_strided_slice %38 {offsets = [0, 128], sizes = [2, 128], strides = [1, 1]} : vector<2x256xf32> to vector<2x128xf32>
    %40 = vector.extract_strided_slice %38 {offsets = [0, 0], sizes = [2, 128], strides = [1, 1]} : vector<2x256xf32> to vector<2x128xf32>
    %41 = vector.broadcast %14 : vector<1x128xf32> to vector<2x128xf32>
    %42 = arith.addf %40, %41 : vector<2x128xf32>
    %43 = vector.extract_strided_slice %42 {offsets = [0, 0], sizes = [2, 96], strides = [1, 1]} : vector<2x128xf32> to vector<2x96xf32>
    %44 = arith.negf %43 : vector<2x96xf32>
    %45 = math.exp %44 : vector<2x96xf32>
    %cst_19 = arith.constant 1.000000e+00 : f32
    %46 = vector.broadcast %cst_19 : f32 to vector<2x96xf32>
    %47 = arith.addf %46, %45 : vector<2x96xf32>
    %48 = arith.divf %46, %47 : vector<2x96xf32>
    %49 = vector.extract_strided_slice %42 {offsets = [0, 96], sizes = [2, 32], strides = [1, 1]} : vector<2x128xf32> to vector<2x32xf32>
    %50 = math.tanh %49 : vector<2x32xf32>
    %51 = vector.extract_strided_slice %48 {offsets = [0, 0], sizes = [2, 32], strides = [1, 1]} : vector<2x96xf32> to vector<2x32xf32>
    %52 = vector.extract_strided_slice %48 {offsets = [0, 32], sizes = [2, 32], strides = [1, 1]} : vector<2x96xf32> to vector<2x32xf32>
    %53 = vector.extract_strided_slice %48 {offsets = [0, 64], sizes = [2, 32], strides = [1, 1]} : vector<2x96xf32> to vector<2x32xf32>
    %54 = arith.mulf %52, %15 : vector<2x32xf32>
    %55 = arith.mulf %51, %50 : vector<2x32xf32>
    %56 = arith.addf %54, %55 : vector<2x32xf32>
    %57 = math.tanh %56 : vector<2x32xf32>
    %58 = arith.mulf %53, %57 : vector<2x32xf32>
    %59 = vector.extract_strided_slice %12 {offsets = [1, 0], sizes = [1, 128], strides = [1, 1]} : vector<16x128xf32> to vector<1x128xf32>
    %60 = vector.extract_strided_slice %12 {offsets = [9, 0], sizes = [1, 128], strides = [1, 1]} : vector<16x128xf32> to vector<1x128xf32>
    %61 = tpu.concatenate %59, %60 in 0 : vector<1x128xf32>, vector<1x128xf32> -> vector<2x128xf32>
    %62 = arith.addf %61, %39 : vector<2x128xf32>
    %63 = vector.extract_strided_slice %62 {offsets = [0, 0], sizes = [2, 96], strides = [1, 1]} : vector<2x128xf32> to vector<2x96xf32>
    %64 = arith.negf %63 : vector<2x96xf32>
    %65 = math.exp %64 : vector<2x96xf32>
    %cst_20 = arith.constant 1.000000e+00 : f32
    %66 = vector.broadcast %cst_20 : f32 to vector<2x96xf32>
    %67 = arith.addf %66, %65 : vector<2x96xf32>
    %68 = arith.divf %66, %67 : vector<2x96xf32>
    %69 = vector.extract_strided_slice %62 {offsets = [0, 96], sizes = [2, 32], strides = [1, 1]} : vector<2x128xf32> to vector<2x32xf32>
    %70 = math.tanh %69 : vector<2x32xf32>
    %71 = vector.extract_strided_slice %68 {offsets = [0, 0], sizes = [2, 32], strides = [1, 1]} : vector<2x96xf32> to vector<2x32xf32>
    %72 = vector.extract_strided_slice %68 {offsets = [0, 32], sizes = [2, 32], strides = [1, 1]} : vector<2x96xf32> to vector<2x32xf32>
    %73 = vector.extract_strided_slice %68 {offsets = [0, 64], sizes = [2, 32], strides = [1, 1]} : vector<2x96xf32> to vector<2x32xf32>
    %74 = arith.mulf %72, %34 : vector<2x32xf32>
    %75 = arith.mulf %71, %70 : vector<2x32xf32>
    %76 = arith.addf %74, %75 : vector<2x32xf32>
    %77 = math.tanh %76 : vector<2x32xf32>
    %78 = arith.mulf %73, %77 : vector<2x32xf32>
    %79 = tpu.concatenate %78, %58 in 1 : vector<2x32xf32>, vector<2x32xf32> -> vector<2x64xf32>
    %cst_21 = arith.constant dense<0.000000e+00> : vector<2x256xf32>
    %80 = tpu.matmul %79, %13, %cst_21 {dimension_numbers = #tpu.dot_dimension_numbers<[1], [0], [0], [1], [0, 0, 1, 1], [], []>} : vector<2x64xf32>, vector<64x256xf32>, vector<2x256xf32> -> vector<2x256xf32>
    %81 = vector.extract_strided_slice %80 {offsets = [0, 128], sizes = [2, 128], strides = [1, 1]} : vector<2x256xf32> to vector<2x128xf32>
    %82 = vector.extract_strided_slice %80 {offsets = [0, 0], sizes = [2, 128], strides = [1, 1]} : vector<2x256xf32> to vector<2x128xf32>
    %83 = vector.broadcast %14 : vector<1x128xf32> to vector<2x128xf32>
    %84 = arith.addf %82, %83 : vector<2x128xf32>
    %85 = vector.extract_strided_slice %84 {offsets = [0, 0], sizes = [2, 96], strides = [1, 1]} : vector<2x128xf32> to vector<2x96xf32>
    %86 = arith.negf %85 : vector<2x96xf32>
    %87 = math.exp %86 : vector<2x96xf32>
    %cst_22 = arith.constant 1.000000e+00 : f32
    %88 = vector.broadcast %cst_22 : f32 to vector<2x96xf32>
    %89 = arith.addf %88, %87 : vector<2x96xf32>
    %90 = arith.divf %88, %89 : vector<2x96xf32>
    %91 = vector.extract_strided_slice %84 {offsets = [0, 96], sizes = [2, 32], strides = [1, 1]} : vector<2x128xf32> to vector<2x32xf32>
    %92 = math.tanh %91 : vector<2x32xf32>
    %93 = vector.extract_strided_slice %90 {offsets = [0, 0], sizes = [2, 32], strides = [1, 1]} : vector<2x96xf32> to vector<2x32xf32>
    %94 = vector.extract_strided_slice %90 {offsets = [0, 32], sizes = [2, 32], strides = [1, 1]} : vector<2x96xf32> to vector<2x32xf32>
    %95 = vector.extract_strided_slice %90 {offsets = [0, 64], sizes = [2, 32], strides = [1, 1]} : vector<2x96xf32> to vector<2x32xf32>
    %96 = arith.mulf %94, %56 : vector<2x32xf32>
    %97 = arith.mulf %93, %92 : vector<2x32xf32>
    %98 = arith.addf %96, %97 : vector<2x32xf32>
    %99 = math.tanh %98 : vector<2x32xf32>
    %100 = arith.mulf %95, %99 : vector<2x32xf32>
    %101 = vector.extract_strided_slice %12 {offsets = [2, 0], sizes = [1, 128], strides = [1, 1]} : vector<16x128xf32> to vector<1x128xf32>
    %102 = vector.extract_strided_slice %12 {offsets = [10, 0], sizes = [1, 128], strides = [1, 1]} : vector<16x128xf32> to vector<1x128xf32>
    %103 = tpu.concatenate %101, %102 in 0 : vector<1x128xf32>, vector<1x128xf32> -> vector<2x128xf32>
    %104 = arith.addf %103, %81 : vector<2x128xf32>
    %105 = vector.extract_strided_slice %104 {offsets = [0, 0], sizes = [2, 96], strides = [1, 1]} : vector<2x128xf32> to vector<2x96xf32>
    %106 = arith.negf %105 : vector<2x96xf32>
    %107 = math.exp %106 : vector<2x96xf32>
    %cst_23 = arith.constant 1.000000e+00 : f32
    %108 = vector.broadcast %cst_23 : f32 to vector<2x96xf32>
    %109 = arith.addf %108, %107 : vector<2x96xf32>
    %110 = arith.divf %108, %109 : vector<2x96xf32>
    %111 = vector.extract_strided_slice %104 {offsets = [0, 96], sizes = [2, 32], strides = [1, 1]} : vector<2x128xf32> to vector<2x32xf32>
    %112 = math.tanh %111 : vector<2x32xf32>
    %113 = vector.extract_strided_slice %110 {offsets = [0, 0], sizes = [2, 32], strides = [1, 1]} : vector<2x96xf32> to vector<2x32xf32>
    %114 = vector.extract_strided_slice %110 {offsets = [0, 32], sizes = [2, 32], strides = [1, 1]} : vector<2x96xf32> to vector<2x32xf32>
    %115 = vector.extract_strided_slice %110 {offsets = [0, 64], sizes = [2, 32], strides = [1, 1]} : vector<2x96xf32> to vector<2x32xf32>
    %116 = arith.mulf %114, %76 : vector<2x32xf32>
    %117 = arith.mulf %113, %112 : vector<2x32xf32>
    %118 = arith.addf %116, %117 : vector<2x32xf32>
    %119 = math.tanh %118 : vector<2x32xf32>
    %120 = arith.mulf %115, %119 : vector<2x32xf32>
    %121 = tpu.concatenate %120, %100 in 1 : vector<2x32xf32>, vector<2x32xf32> -> vector<2x64xf32>
    %cst_24 = arith.constant dense<0.000000e+00> : vector<2x256xf32>
    %122 = tpu.matmul %121, %13, %cst_24 {dimension_numbers = #tpu.dot_dimension_numbers<[1], [0], [0], [1], [0, 0, 1, 1], [], []>} : vector<2x64xf32>, vector<64x256xf32>, vector<2x256xf32> -> vector<2x256xf32>
    %123 = vector.extract_strided_slice %122 {offsets = [0, 128], sizes = [2, 128], strides = [1, 1]} : vector<2x256xf32> to vector<2x128xf32>
    %124 = vector.extract_strided_slice %122 {offsets = [0, 0], sizes = [2, 128], strides = [1, 1]} : vector<2x256xf32> to vector<2x128xf32>
    %125 = vector.broadcast %14 : vector<1x128xf32> to vector<2x128xf32>
    %126 = arith.addf %124, %125 : vector<2x128xf32>
    %127 = vector.extract_strided_slice %126 {offsets = [0, 0], sizes = [2, 96], strides = [1, 1]} : vector<2x128xf32> to vector<2x96xf32>
    %128 = arith.negf %127 : vector<2x96xf32>
    %129 = math.exp %128 : vector<2x96xf32>
    %cst_25 = arith.constant 1.000000e+00 : f32
    %130 = vector.broadcast %cst_25 : f32 to vector<2x96xf32>
    %131 = arith.addf %130, %129 : vector<2x96xf32>
    %132 = arith.divf %130, %131 : vector<2x96xf32>
    %133 = vector.extract_strided_slice %126 {offsets = [0, 96], sizes = [2, 32], strides = [1, 1]} : vector<2x128xf32> to vector<2x32xf32>
    %134 = math.tanh %133 : vector<2x32xf32>
    %135 = vector.extract_strided_slice %132 {offsets = [0, 0], sizes = [2, 32], strides = [1, 1]} : vector<2x96xf32> to vector<2x32xf32>
    %136 = vector.extract_strided_slice %132 {offsets = [0, 32], sizes = [2, 32], strides = [1, 1]} : vector<2x96xf32> to vector<2x32xf32>
    %137 = vector.extract_strided_slice %132 {offsets = [0, 64], sizes = [2, 32], strides = [1, 1]} : vector<2x96xf32> to vector<2x32xf32>
    %138 = arith.mulf %136, %98 : vector<2x32xf32>
    %139 = arith.mulf %135, %134 : vector<2x32xf32>
    %140 = arith.addf %138, %139 : vector<2x32xf32>
    %141 = math.tanh %140 : vector<2x32xf32>
    %142 = arith.mulf %137, %141 : vector<2x32xf32>
    %143 = vector.extract_strided_slice %12 {offsets = [3, 0], sizes = [1, 128], strides = [1, 1]} : vector<16x128xf32> to vector<1x128xf32>
    %144 = vector.extract_strided_slice %12 {offsets = [11, 0], sizes = [1, 128], strides = [1, 1]} : vector<16x128xf32> to vector<1x128xf32>
    %145 = tpu.concatenate %143, %144 in 0 : vector<1x128xf32>, vector<1x128xf32> -> vector<2x128xf32>
    %146 = arith.addf %145, %123 : vector<2x128xf32>
    %147 = vector.extract_strided_slice %146 {offsets = [0, 0], sizes = [2, 96], strides = [1, 1]} : vector<2x128xf32> to vector<2x96xf32>
    %148 = arith.negf %147 : vector<2x96xf32>
    %149 = math.exp %148 : vector<2x96xf32>
    %cst_26 = arith.constant 1.000000e+00 : f32
    %150 = vector.broadcast %cst_26 : f32 to vector<2x96xf32>
    %151 = arith.addf %150, %149 : vector<2x96xf32>
    %152 = arith.divf %150, %151 : vector<2x96xf32>
    %153 = vector.extract_strided_slice %146 {offsets = [0, 96], sizes = [2, 32], strides = [1, 1]} : vector<2x128xf32> to vector<2x32xf32>
    %154 = math.tanh %153 : vector<2x32xf32>
    %155 = vector.extract_strided_slice %152 {offsets = [0, 0], sizes = [2, 32], strides = [1, 1]} : vector<2x96xf32> to vector<2x32xf32>
    %156 = vector.extract_strided_slice %152 {offsets = [0, 32], sizes = [2, 32], strides = [1, 1]} : vector<2x96xf32> to vector<2x32xf32>
    %157 = vector.extract_strided_slice %152 {offsets = [0, 64], sizes = [2, 32], strides = [1, 1]} : vector<2x96xf32> to vector<2x32xf32>
    %158 = arith.mulf %156, %118 : vector<2x32xf32>
    %159 = arith.mulf %155, %154 : vector<2x32xf32>
    %160 = arith.addf %158, %159 : vector<2x32xf32>
    %161 = math.tanh %160 : vector<2x32xf32>
    %162 = arith.mulf %157, %161 : vector<2x32xf32>
    %163 = tpu.concatenate %162, %142 in 1 : vector<2x32xf32>, vector<2x32xf32> -> vector<2x64xf32>
    %cst_27 = arith.constant dense<0.000000e+00> : vector<2x256xf32>
    %164 = tpu.matmul %163, %13, %cst_27 {dimension_numbers = #tpu.dot_dimension_numbers<[1], [0], [0], [1], [0, 0, 1, 1], [], []>} : vector<2x64xf32>, vector<64x256xf32>, vector<2x256xf32> -> vector<2x256xf32>
    %165 = vector.extract_strided_slice %164 {offsets = [0, 128], sizes = [2, 128], strides = [1, 1]} : vector<2x256xf32> to vector<2x128xf32>
    %166 = vector.extract_strided_slice %164 {offsets = [0, 0], sizes = [2, 128], strides = [1, 1]} : vector<2x256xf32> to vector<2x128xf32>
    %167 = vector.broadcast %14 : vector<1x128xf32> to vector<2x128xf32>
    %168 = arith.addf %166, %167 : vector<2x128xf32>
    %169 = vector.extract_strided_slice %168 {offsets = [0, 0], sizes = [2, 96], strides = [1, 1]} : vector<2x128xf32> to vector<2x96xf32>
    %170 = arith.negf %169 : vector<2x96xf32>
    %171 = math.exp %170 : vector<2x96xf32>
    %cst_28 = arith.constant 1.000000e+00 : f32
    %172 = vector.broadcast %cst_28 : f32 to vector<2x96xf32>
    %173 = arith.addf %172, %171 : vector<2x96xf32>
    %174 = arith.divf %172, %173 : vector<2x96xf32>
    %175 = vector.extract_strided_slice %168 {offsets = [0, 96], sizes = [2, 32], strides = [1, 1]} : vector<2x128xf32> to vector<2x32xf32>
    %176 = math.tanh %175 : vector<2x32xf32>
    %177 = vector.extract_strided_slice %174 {offsets = [0, 0], sizes = [2, 32], strides = [1, 1]} : vector<2x96xf32> to vector<2x32xf32>
    %178 = vector.extract_strided_slice %174 {offsets = [0, 32], sizes = [2, 32], strides = [1, 1]} : vector<2x96xf32> to vector<2x32xf32>
    %179 = vector.extract_strided_slice %174 {offsets = [0, 64], sizes = [2, 32], strides = [1, 1]} : vector<2x96xf32> to vector<2x32xf32>
    %180 = arith.mulf %178, %140 : vector<2x32xf32>
    %181 = arith.mulf %177, %176 : vector<2x32xf32>
    %182 = arith.addf %180, %181 : vector<2x32xf32>
    %183 = math.tanh %182 : vector<2x32xf32>
    %184 = arith.mulf %179, %183 : vector<2x32xf32>
    %185 = vector.extract_strided_slice %12 {offsets = [4, 0], sizes = [1, 128], strides = [1, 1]} : vector<16x128xf32> to vector<1x128xf32>
    %186 = vector.extract_strided_slice %12 {offsets = [12, 0], sizes = [1, 128], strides = [1, 1]} : vector<16x128xf32> to vector<1x128xf32>
    %187 = tpu.concatenate %185, %186 in 0 : vector<1x128xf32>, vector<1x128xf32> -> vector<2x128xf32>
    %188 = arith.addf %187, %165 : vector<2x128xf32>
    %189 = vector.extract_strided_slice %188 {offsets = [0, 0], sizes = [2, 96], strides = [1, 1]} : vector<2x128xf32> to vector<2x96xf32>
    %190 = arith.negf %189 : vector<2x96xf32>
    %191 = math.exp %190 : vector<2x96xf32>
    %cst_29 = arith.constant 1.000000e+00 : f32
    %192 = vector.broadcast %cst_29 : f32 to vector<2x96xf32>
    %193 = arith.addf %192, %191 : vector<2x96xf32>
    %194 = arith.divf %192, %193 : vector<2x96xf32>
    %195 = vector.extract_strided_slice %188 {offsets = [0, 96], sizes = [2, 32], strides = [1, 1]} : vector<2x128xf32> to vector<2x32xf32>
    %196 = math.tanh %195 : vector<2x32xf32>
    %197 = vector.extract_strided_slice %194 {offsets = [0, 0], sizes = [2, 32], strides = [1, 1]} : vector<2x96xf32> to vector<2x32xf32>
    %198 = vector.extract_strided_slice %194 {offsets = [0, 32], sizes = [2, 32], strides = [1, 1]} : vector<2x96xf32> to vector<2x32xf32>
    %199 = vector.extract_strided_slice %194 {offsets = [0, 64], sizes = [2, 32], strides = [1, 1]} : vector<2x96xf32> to vector<2x32xf32>
    %200 = arith.mulf %198, %160 : vector<2x32xf32>
    %201 = arith.mulf %197, %196 : vector<2x32xf32>
    %202 = arith.addf %200, %201 : vector<2x32xf32>
    %203 = math.tanh %202 : vector<2x32xf32>
    %204 = arith.mulf %199, %203 : vector<2x32xf32>
    %205 = tpu.concatenate %204, %184 in 1 : vector<2x32xf32>, vector<2x32xf32> -> vector<2x64xf32>
    %cst_30 = arith.constant dense<0.000000e+00> : vector<2x256xf32>
    %206 = tpu.matmul %205, %13, %cst_30 {dimension_numbers = #tpu.dot_dimension_numbers<[1], [0], [0], [1], [0, 0, 1, 1], [], []>} : vector<2x64xf32>, vector<64x256xf32>, vector<2x256xf32> -> vector<2x256xf32>
    %207 = vector.extract_strided_slice %206 {offsets = [0, 128], sizes = [2, 128], strides = [1, 1]} : vector<2x256xf32> to vector<2x128xf32>
    %208 = vector.extract_strided_slice %206 {offsets = [0, 0], sizes = [2, 128], strides = [1, 1]} : vector<2x256xf32> to vector<2x128xf32>
    %209 = vector.broadcast %14 : vector<1x128xf32> to vector<2x128xf32>
    %210 = arith.addf %208, %209 : vector<2x128xf32>
    %211 = vector.extract_strided_slice %210 {offsets = [0, 0], sizes = [2, 96], strides = [1, 1]} : vector<2x128xf32> to vector<2x96xf32>
    %212 = arith.negf %211 : vector<2x96xf32>
    %213 = math.exp %212 : vector<2x96xf32>
    %cst_31 = arith.constant 1.000000e+00 : f32
    %214 = vector.broadcast %cst_31 : f32 to vector<2x96xf32>
    %215 = arith.addf %214, %213 : vector<2x96xf32>
    %216 = arith.divf %214, %215 : vector<2x96xf32>
    %217 = vector.extract_strided_slice %210 {offsets = [0, 96], sizes = [2, 32], strides = [1, 1]} : vector<2x128xf32> to vector<2x32xf32>
    %218 = math.tanh %217 : vector<2x32xf32>
    %219 = vector.extract_strided_slice %216 {offsets = [0, 0], sizes = [2, 32], strides = [1, 1]} : vector<2x96xf32> to vector<2x32xf32>
    %220 = vector.extract_strided_slice %216 {offsets = [0, 32], sizes = [2, 32], strides = [1, 1]} : vector<2x96xf32> to vector<2x32xf32>
    %221 = vector.extract_strided_slice %216 {offsets = [0, 64], sizes = [2, 32], strides = [1, 1]} : vector<2x96xf32> to vector<2x32xf32>
    %222 = arith.mulf %220, %182 : vector<2x32xf32>
    %223 = arith.mulf %219, %218 : vector<2x32xf32>
    %224 = arith.addf %222, %223 : vector<2x32xf32>
    %225 = math.tanh %224 : vector<2x32xf32>
    %226 = arith.mulf %221, %225 : vector<2x32xf32>
    %227 = vector.extract_strided_slice %12 {offsets = [5, 0], sizes = [1, 128], strides = [1, 1]} : vector<16x128xf32> to vector<1x128xf32>
    %228 = vector.extract_strided_slice %12 {offsets = [13, 0], sizes = [1, 128], strides = [1, 1]} : vector<16x128xf32> to vector<1x128xf32>
    %229 = tpu.concatenate %227, %228 in 0 : vector<1x128xf32>, vector<1x128xf32> -> vector<2x128xf32>
    %230 = arith.addf %229, %207 : vector<2x128xf32>
    %231 = vector.extract_strided_slice %230 {offsets = [0, 0], sizes = [2, 96], strides = [1, 1]} : vector<2x128xf32> to vector<2x96xf32>
    %232 = arith.negf %231 : vector<2x96xf32>
    %233 = math.exp %232 : vector<2x96xf32>
    %cst_32 = arith.constant 1.000000e+00 : f32
    %234 = vector.broadcast %cst_32 : f32 to vector<2x96xf32>
    %235 = arith.addf %234, %233 : vector<2x96xf32>
    %236 = arith.divf %234, %235 : vector<2x96xf32>
    %237 = vector.extract_strided_slice %230 {offsets = [0, 96], sizes = [2, 32], strides = [1, 1]} : vector<2x128xf32> to vector<2x32xf32>
    %238 = math.tanh %237 : vector<2x32xf32>
    %239 = vector.extract_strided_slice %236 {offsets = [0, 0], sizes = [2, 32], strides = [1, 1]} : vector<2x96xf32> to vector<2x32xf32>
    %240 = vector.extract_strided_slice %236 {offsets = [0, 32], sizes = [2, 32], strides = [1, 1]} : vector<2x96xf32> to vector<2x32xf32>
    %241 = vector.extract_strided_slice %236 {offsets = [0, 64], sizes = [2, 32], strides = [1, 1]} : vector<2x96xf32> to vector<2x32xf32>
    %242 = arith.mulf %240, %202 : vector<2x32xf32>
    %243 = arith.mulf %239, %238 : vector<2x32xf32>
    %244 = arith.addf %242, %243 : vector<2x32xf32>
    %245 = math.tanh %244 : vector<2x32xf32>
    %246 = arith.mulf %241, %245 : vector<2x32xf32>
    %247 = tpu.concatenate %246, %226 in 1 : vector<2x32xf32>, vector<2x32xf32> -> vector<2x64xf32>
    %cst_33 = arith.constant dense<0.000000e+00> : vector<2x256xf32>
    %248 = tpu.matmul %247, %13, %cst_33 {dimension_numbers = #tpu.dot_dimension_numbers<[1], [0], [0], [1], [0, 0, 1, 1], [], []>} : vector<2x64xf32>, vector<64x256xf32>, vector<2x256xf32> -> vector<2x256xf32>
    %249 = vector.extract_strided_slice %248 {offsets = [0, 128], sizes = [2, 128], strides = [1, 1]} : vector<2x256xf32> to vector<2x128xf32>
    %250 = vector.extract_strided_slice %248 {offsets = [0, 0], sizes = [2, 128], strides = [1, 1]} : vector<2x256xf32> to vector<2x128xf32>
    %251 = vector.broadcast %14 : vector<1x128xf32> to vector<2x128xf32>
    %252 = arith.addf %250, %251 : vector<2x128xf32>
    %253 = vector.extract_strided_slice %252 {offsets = [0, 0], sizes = [2, 96], strides = [1, 1]} : vector<2x128xf32> to vector<2x96xf32>
    %254 = arith.negf %253 : vector<2x96xf32>
    %255 = math.exp %254 : vector<2x96xf32>
    %cst_34 = arith.constant 1.000000e+00 : f32
    %256 = vector.broadcast %cst_34 : f32 to vector<2x96xf32>
    %257 = arith.addf %256, %255 : vector<2x96xf32>
    %258 = arith.divf %256, %257 : vector<2x96xf32>
    %259 = vector.extract_strided_slice %252 {offsets = [0, 96], sizes = [2, 32], strides = [1, 1]} : vector<2x128xf32> to vector<2x32xf32>
    %260 = math.tanh %259 : vector<2x32xf32>
    %261 = vector.extract_strided_slice %258 {offsets = [0, 0], sizes = [2, 32], strides = [1, 1]} : vector<2x96xf32> to vector<2x32xf32>
    %262 = vector.extract_strided_slice %258 {offsets = [0, 32], sizes = [2, 32], strides = [1, 1]} : vector<2x96xf32> to vector<2x32xf32>
    %263 = vector.extract_strided_slice %258 {offsets = [0, 64], sizes = [2, 32], strides = [1, 1]} : vector<2x96xf32> to vector<2x32xf32>
    %264 = arith.mulf %262, %224 : vector<2x32xf32>
    %265 = arith.mulf %261, %260 : vector<2x32xf32>
    %266 = arith.addf %264, %265 : vector<2x32xf32>
    %267 = math.tanh %266 : vector<2x32xf32>
    %268 = arith.mulf %263, %267 : vector<2x32xf32>
    %269 = vector.extract_strided_slice %12 {offsets = [6, 0], sizes = [1, 128], strides = [1, 1]} : vector<16x128xf32> to vector<1x128xf32>
    %270 = vector.extract_strided_slice %12 {offsets = [14, 0], sizes = [1, 128], strides = [1, 1]} : vector<16x128xf32> to vector<1x128xf32>
    %271 = tpu.concatenate %269, %270 in 0 : vector<1x128xf32>, vector<1x128xf32> -> vector<2x128xf32>
    %272 = arith.addf %271, %249 : vector<2x128xf32>
    %273 = vector.extract_strided_slice %272 {offsets = [0, 0], sizes = [2, 96], strides = [1, 1]} : vector<2x128xf32> to vector<2x96xf32>
    %274 = arith.negf %273 : vector<2x96xf32>
    %275 = math.exp %274 : vector<2x96xf32>
    %cst_35 = arith.constant 1.000000e+00 : f32
    %276 = vector.broadcast %cst_35 : f32 to vector<2x96xf32>
    %277 = arith.addf %276, %275 : vector<2x96xf32>
    %278 = arith.divf %276, %277 : vector<2x96xf32>
    %279 = vector.extract_strided_slice %272 {offsets = [0, 96], sizes = [2, 32], strides = [1, 1]} : vector<2x128xf32> to vector<2x32xf32>
    %280 = math.tanh %279 : vector<2x32xf32>
    %281 = vector.extract_strided_slice %278 {offsets = [0, 0], sizes = [2, 32], strides = [1, 1]} : vector<2x96xf32> to vector<2x32xf32>
    %282 = vector.extract_strided_slice %278 {offsets = [0, 32], sizes = [2, 32], strides = [1, 1]} : vector<2x96xf32> to vector<2x32xf32>
    %283 = vector.extract_strided_slice %278 {offsets = [0, 64], sizes = [2, 32], strides = [1, 1]} : vector<2x96xf32> to vector<2x32xf32>
    %284 = arith.mulf %282, %244 : vector<2x32xf32>
    %285 = arith.mulf %281, %280 : vector<2x32xf32>
    %286 = arith.addf %284, %285 : vector<2x32xf32>
    %287 = math.tanh %286 : vector<2x32xf32>
    %288 = arith.mulf %283, %287 : vector<2x32xf32>
    %289 = tpu.concatenate %288, %268 in 1 : vector<2x32xf32>, vector<2x32xf32> -> vector<2x64xf32>
    %cst_36 = arith.constant dense<0.000000e+00> : vector<2x256xf32>
    %290 = tpu.matmul %289, %13, %cst_36 {dimension_numbers = #tpu.dot_dimension_numbers<[1], [0], [0], [1], [0, 0, 1, 1], [], []>} : vector<2x64xf32>, vector<64x256xf32>, vector<2x256xf32> -> vector<2x256xf32>
    %291 = vector.extract_strided_slice %290 {offsets = [0, 128], sizes = [2, 128], strides = [1, 1]} : vector<2x256xf32> to vector<2x128xf32>
    %292 = vector.extract_strided_slice %290 {offsets = [0, 0], sizes = [2, 128], strides = [1, 1]} : vector<2x256xf32> to vector<2x128xf32>
    %293 = vector.broadcast %14 : vector<1x128xf32> to vector<2x128xf32>
    %294 = arith.addf %292, %293 : vector<2x128xf32>
    %295 = vector.extract_strided_slice %294 {offsets = [0, 0], sizes = [2, 96], strides = [1, 1]} : vector<2x128xf32> to vector<2x96xf32>
    %296 = arith.negf %295 : vector<2x96xf32>
    %297 = math.exp %296 : vector<2x96xf32>
    %cst_37 = arith.constant 1.000000e+00 : f32
    %298 = vector.broadcast %cst_37 : f32 to vector<2x96xf32>
    %299 = arith.addf %298, %297 : vector<2x96xf32>
    %300 = arith.divf %298, %299 : vector<2x96xf32>
    %301 = vector.extract_strided_slice %294 {offsets = [0, 96], sizes = [2, 32], strides = [1, 1]} : vector<2x128xf32> to vector<2x32xf32>
    %302 = math.tanh %301 : vector<2x32xf32>
    %303 = vector.extract_strided_slice %300 {offsets = [0, 0], sizes = [2, 32], strides = [1, 1]} : vector<2x96xf32> to vector<2x32xf32>
    %304 = vector.extract_strided_slice %300 {offsets = [0, 32], sizes = [2, 32], strides = [1, 1]} : vector<2x96xf32> to vector<2x32xf32>
    %305 = vector.extract_strided_slice %300 {offsets = [0, 64], sizes = [2, 32], strides = [1, 1]} : vector<2x96xf32> to vector<2x32xf32>
    %306 = arith.mulf %304, %266 : vector<2x32xf32>
    %307 = arith.mulf %303, %302 : vector<2x32xf32>
    %308 = arith.addf %306, %307 : vector<2x32xf32>
    %309 = math.tanh %308 : vector<2x32xf32>
    %310 = arith.mulf %305, %309 : vector<2x32xf32>
    %311 = vector.extract_strided_slice %12 {offsets = [7, 0], sizes = [1, 128], strides = [1, 1]} : vector<16x128xf32> to vector<1x128xf32>
    %312 = vector.extract_strided_slice %12 {offsets = [15, 0], sizes = [1, 128], strides = [1, 1]} : vector<16x128xf32> to vector<1x128xf32>
    %313 = tpu.concatenate %311, %312 in 0 : vector<1x128xf32>, vector<1x128xf32> -> vector<2x128xf32>
    %314 = arith.addf %313, %291 : vector<2x128xf32>
    %315 = vector.extract_strided_slice %314 {offsets = [0, 0], sizes = [2, 96], strides = [1, 1]} : vector<2x128xf32> to vector<2x96xf32>
    %316 = arith.negf %315 : vector<2x96xf32>
    %317 = math.exp %316 : vector<2x96xf32>
    %cst_38 = arith.constant 1.000000e+00 : f32
    %318 = vector.broadcast %cst_38 : f32 to vector<2x96xf32>
    %319 = arith.addf %318, %317 : vector<2x96xf32>
    %320 = arith.divf %318, %319 : vector<2x96xf32>
    %321 = vector.extract_strided_slice %314 {offsets = [0, 96], sizes = [2, 32], strides = [1, 1]} : vector<2x128xf32> to vector<2x32xf32>
    %322 = math.tanh %321 : vector<2x32xf32>
    %323 = vector.extract_strided_slice %320 {offsets = [0, 0], sizes = [2, 32], strides = [1, 1]} : vector<2x96xf32> to vector<2x32xf32>
    %324 = vector.extract_strided_slice %320 {offsets = [0, 32], sizes = [2, 32], strides = [1, 1]} : vector<2x96xf32> to vector<2x32xf32>
    %325 = vector.extract_strided_slice %320 {offsets = [0, 64], sizes = [2, 32], strides = [1, 1]} : vector<2x96xf32> to vector<2x32xf32>
    %326 = arith.mulf %324, %286 : vector<2x32xf32>
    %327 = arith.mulf %323, %322 : vector<2x32xf32>
    %328 = arith.addf %326, %327 : vector<2x32xf32>
    %329 = math.tanh %328 : vector<2x32xf32>
    %330 = arith.mulf %325, %329 : vector<2x32xf32>
    %331 = tpu.concatenate %330, %310 in 1 : vector<2x32xf32>, vector<2x32xf32> -> vector<2x64xf32>
    %cst_39 = arith.constant dense<0.000000e+00> : vector<2x256xf32>
    %332 = tpu.matmul %331, %13, %cst_39 {dimension_numbers = #tpu.dot_dimension_numbers<[1], [0], [0], [1], [0, 0, 1, 1], [], []>} : vector<2x64xf32>, vector<64x256xf32>, vector<2x256xf32> -> vector<2x256xf32>
    %333 = vector.extract_strided_slice %332 {offsets = [0, 0], sizes = [2, 128], strides = [1, 1]} : vector<2x256xf32> to vector<2x128xf32>
    %334 = vector.broadcast %14 : vector<1x128xf32> to vector<2x128xf32>
    %335 = arith.addf %333, %334 : vector<2x128xf32>
    %336 = vector.extract_strided_slice %335 {offsets = [0, 0], sizes = [2, 96], strides = [1, 1]} : vector<2x128xf32> to vector<2x96xf32>
    %337 = arith.negf %336 : vector<2x96xf32>
    %338 = math.exp %337 : vector<2x96xf32>
    %cst_40 = arith.constant 1.000000e+00 : f32
    %339 = vector.broadcast %cst_40 : f32 to vector<2x96xf32>
    %340 = arith.addf %339, %338 : vector<2x96xf32>
    %341 = arith.divf %339, %340 : vector<2x96xf32>
    %342 = vector.extract_strided_slice %335 {offsets = [0, 96], sizes = [2, 32], strides = [1, 1]} : vector<2x128xf32> to vector<2x32xf32>
    %343 = math.tanh %342 : vector<2x32xf32>
    %344 = vector.extract_strided_slice %341 {offsets = [0, 0], sizes = [2, 32], strides = [1, 1]} : vector<2x96xf32> to vector<2x32xf32>
    %345 = vector.extract_strided_slice %341 {offsets = [0, 32], sizes = [2, 32], strides = [1, 1]} : vector<2x96xf32> to vector<2x32xf32>
    %346 = vector.extract_strided_slice %341 {offsets = [0, 64], sizes = [2, 32], strides = [1, 1]} : vector<2x96xf32> to vector<2x32xf32>
    %347 = arith.mulf %345, %308 : vector<2x32xf32>
    %348 = arith.mulf %344, %343 : vector<2x32xf32>
    %349 = arith.addf %347, %348 : vector<2x32xf32>
    %350 = math.tanh %349 : vector<2x32xf32>
    %351 = arith.mulf %346, %350 : vector<2x32xf32>
    %352 = tpu.concatenate %58, %100, %142, %184, %226, %268, %310, %351 in 1 : vector<2x32xf32>, vector<2x32xf32>, vector<2x32xf32>, vector<2x32xf32>, vector<2x32xf32>, vector<2x32xf32>, vector<2x32xf32>, vector<2x32xf32> -> vector<2x256xf32>
    %c0_41 = arith.constant 0 : index
    %c0_42 = arith.constant 0 : index
    %353 = vector.load %arg7[%c0_41, %c0_42] : memref<256x128xf32, #tpu.memory_space<vmem>>, vector<256x128xf32>
    %cst_43 = arith.constant dense<0.000000e+00> : vector<2x128xf32>
    %354 = tpu.matmul %352, %353, %cst_43 {dimension_numbers = #tpu.dot_dimension_numbers<[1], [0], [0], [1], [0, 0, 1, 1], [], []>} : vector<2x256xf32>, vector<256x128xf32>, vector<2x128xf32> -> vector<2x128xf32>
    %c0_44 = arith.constant 0 : index
    %c0_45 = arith.constant 0 : index
    %355 = vector.load %arg8[%c0_44, %c0_45] : memref<1x128xf32, #tpu.memory_space<vmem>>, vector<1x128xf32>
    %356 = vector.broadcast %355 : vector<1x128xf32> to vector<2x128xf32>
    %357 = arith.addf %354, %356 : vector<2x128xf32>
    %358 = arith.negf %357 : vector<2x128xf32>
    %359 = math.exp %358 : vector<2x128xf32>
    %cst_46 = arith.constant 1.000000e+00 : f32
    %360 = vector.broadcast %cst_46 : f32 to vector<2x128xf32>
    %361 = arith.addf %360, %359 : vector<2x128xf32>
    %362 = arith.divf %360, %361 : vector<2x128xf32>
    %c0_47 = arith.constant 0 : index
    %c0_48 = arith.constant 0 : index
    %363 = vector.load %arg9[%c0_47, %c0_48] : memref<2x128xf32, #tpu.memory_space<vmem>>, vector<2x128xf32>
    tpu.vector_store %arg9[%c0_47, %c0_48], %362 {strides = array<i32>} : memref<2x128xf32, #tpu.memory_space<vmem>>, vector<2x128xf32>,
    return
  }
}

</mosaic_0001>

<llo_original>
// kernel: generator_batch_forward.1
$region0: #{generator_batch_forward.1}
  #allocation0 [shape = 'u32[]', space=smem, size = 0x4, offset = 0x4, fixed_abs, tag = 'smem constant byte address 0x4 - core index']
  #allocation1 [shape = 'u32[72,128]{1,0:T(1,128)}', space=vmem, size = 0x9000, scoped, tag = 'internal scratch']
  %s0 = inlined_call_operand.hbm [shape: f32[16,16], index: 0, kind: input, shape index: {}]
  %s1 = inlined_call_operand.hbm [shape: f32[16,32], index: 1, kind: input, shape index: {}]
  %s2 = inlined_call_operand.vmem [shape: f32[1,32], index: 2, kind: input, shape index: {}]
  %s3 = inlined_call_operand.hbm [shape: f32[32,128], index: 3, kind: input, shape index: {}]
  %s4 = inlined_call_operand.hbm [shape: f32[1,128], index: 4, kind: input, shape index: {}]
  %s5 = inlined_call_operand.hbm [shape: f32[64,256], index: 5, kind: input, shape index: {}]
  %s6 = inlined_call_operand.vmem [shape: f32[1,128], index: 6, kind: input, shape index: {}]
  %s7 = inlined_call_operand.hbm [shape: f32[256,128], index: 7, kind: input, shape index: {}]
  %s8 = inlined_call_operand.vmem [shape: f32[1,128], index: 8, kind: input, shape index: {}]
  %s9 = inlined_call_operand.vmem [shape: f32[2,128], index: 9, kind: output, shape index: {}]
  %s10 = sld [smem:[#allocation0]]
  $region70: #{generator_batch_forward.1} parent=0
    _
  %s12 = ssub.s32 1, %s10
  %s13 = scalar_select 0, %s12, %s10
  $region1: #{generator_batch_forward.1} parent=0
    #allocation2 [shape = 'u8[8192]{0}', space=vmem, size = 0x2000, scoped, tag = 'input window, operand 0, single buffered']
    #allocation3 [shape = 's32[1]{0}', space=sflag, size = 0x4, scoped, tag = 'scoped memory for generator_batch_forward.1']
    #allocation4 [shape = 'u8[8192]{0}', space=vmem, size = 0x2000, scoped, tag = 'input window, operand 1, single buffered']
    #allocation5 [shape = 's32[1]{0}', space=sflag, size = 0x4, scoped, tag = 'scoped memory for generator_batch_forward.1']
    #allocation6 [shape = 'u8[16384]{0}', space=vmem, size = 0x4000, scoped, tag = 'input window, operand 3, single buffered']
    #allocation7 [shape = 'u8[512]{0}', space=vmem, size = 0x400, scoped, tag = 'input window, operand 4, single buffered']
    #allocation8 [shape = 's32[1]{0}', space=sflag, size = 0x4, scoped, tag = 'scoped memory for generator_batch_forward.1']
    #allocation9 [shape = 'u8[65536]{0}', space=vmem, size = 0x10000, scoped, tag = 'input window, operand 5, single buffered']
    #allocation10 [shape = 'u8[131072]{0}', space=vmem, size = 0x20000, scoped, tag = 'input window, operand 7, single buffered']
    #allocation11 [shape = 's32[1]{0}', space=sflag, size = 0x4, scoped, tag = 'scoped memory for generator_batch_forward.1']
    %14 = vsyncpa [#allocation3], 0
    %15 = vsyncpa [#allocation5], 0
    %16 = vsyncpa [#allocation8], 0
    %17 = vsyncpa [#allocation11], 0
    // Predicated region
    $region2: #{generator_batch_forward.1} parent=1 // pred_check
      _
    $region3: #{generator_batch_forward.1} parent=1 // pred_check_branch
      %19 = sbr.rel (0) target = $region5
    $region4: #{generator_batch_forward.1} parent=1 // pred_region
      %21 = vsyncadd [#allocation3], 0
      %s22 = sshll.u32 %s0, 4
      %s23 = int_to_ptr.hbm [resolvable:$true] %s22
      %s24 = sshll.u32 [#allocation2], 4
      %s25 = int_to_ptr.vmem [resolvable:$true] %s24
      %30 = dma.hbm_to_vmem [thread:$0]  %s23, 256, %s25, [#allocation3], 128, 128, 8
    $region5: #{generator_batch_forward.1} parent=1 // pred_fallthru
      _
    // Predicated region
    $region6: #{generator_batch_forward.1} parent=1 // pred_check
      _
    $region7: #{generator_batch_forward.1} parent=1 // pred_check_branch
      %32 = sbr.rel (0) target = $region9
    $region8: #{generator_batch_forward.1} parent=1 // pred_region
      %34 = vsyncadd [#allocation5], 0
      %s35 = sshll.u32 %s1, 4
      %s36 = int_to_ptr.hbm [resolvable:$true] %s35
      %s37 = sshll.u32 [#allocation4], 4
      %s38 = int_to_ptr.vmem [resolvable:$true] %s37
      %43 = dma.hbm_to_vmem [thread:$0]  %s36, 256, %s38, [#allocation5], 128, 128, 8
    $region9: #{generator_batch_forward.1} parent=1 // pred_fallthru
      _
    // Predicated region
    $region10: #{generator_batch_forward.1} parent=1 // pred_check
      _
    $region11: #{generator_batch_forward.1} parent=1 // pred_check_branch
      %45 = sbr.rel (0) target = $region13
    $region12: #{generator_batch_forward.1} parent=1 // pred_region
      _
    $region13: #{generator_batch_forward.1} parent=1 // pred_fallthru
      _
    // Predicated region
    $region14: #{generator_batch_forward.1} parent=1 // pred_check
      _
    $region15: #{generator_batch_forward.1} parent=1 // pred_check_branch
      %47 = sbr.rel (0) target = $region17
    $region16: #{generator_batch_forward.1} parent=1 // pred_region
      %49 = vsyncadd [#allocation5], 0
      %s50 = sshll.u32 %s3, 4
      %s51 = int_to_ptr.hbm [resolvable:$true] %s50
      %s52 = sshll.u32 [#allocation6], 4
      %s53 = int_to_ptr.vmem [resolvable:$true] %s52
      %58 = dma.hbm_to_vmem [thread:$0]  %s51, 512, %s53, [#allocation5], 128, 128, 8
    $region17: #{generator_batch_forward.1} parent=1 // pred_fallthru
      _
    // Predicated region
    $region18: #{generator_batch_forward.1} parent=1 // pred_check
      _
    $region19: #{generator_batch_forward.1} parent=1 // pred_check_branch
      %60 = sbr.rel (0) target = $region21
    $region20: #{generator_batch_forward.1} parent=1 // pred_region
      %62 = vsyncadd [#allocation8], 0
      %s64 = sshll.u32 %s4, 4
      %s65 = int_to_ptr.hbm [resolvable:$true] %s64
      %s66 = sshll.u32 [#allocation7], 4
      %s67 = int_to_ptr.vmem [resolvable:$true] %s66
      %69 = dma.hbm_to_vmem [thread:$0]  %s65, 16, %s67, [#allocation8]
    $region21: #{generator_batch_forward.1} parent=1 // pred_fallthru
      _
    // Predicated region
    $region22: #{generator_batch_forward.1} parent=1 // pred_check
      _
    $region23: #{generator_batch_forward.1} parent=1 // pred_check_branch
      %71 = sbr.rel (0) target = $region25
    $region24: #{generator_batch_forward.1} parent=1 // pred_region
      %73 = vsyncadd [#allocation8], 0
      %s74 = sshll.u32 %s5, 4
      %s75 = int_to_ptr.hbm [resolvable:$true] %s74
      %s76 = sshll.u32 [#allocation9], 4
      %s77 = int_to_ptr.vmem [resolvable:$true] %s76
      %82 = dma.hbm_to_vmem [thread:$0]  %s75, 2048, %s77, [#allocation8], 256, 256, 16
    $region25: #{generator_batch_forward.1} parent=1 // pred_fallthru
      _
    // Predicated region
    $region26: #{generator_batch_forward.1} parent=1 // pred_check
      _
    $region27: #{generator_batch_forward.1} parent=1 // pred_check_branch
      %84 = sbr.rel (0) target = $region29
    $region28: #{generator_batch_forward.1} parent=1 // pred_region
      _
    $region29: #{generator_batch_forward.1} parent=1 // pred_fallthru
      _
    // Predicated region
    $region30: #{generator_batch_forward.1} parent=1 // pred_check
      _
    $region31: #{generator_batch_forward.1} parent=1 // pred_check_branch
      %86 = sbr.rel (0) target = $region33
    $region32: #{generator_batch_forward.1} parent=1 // pred_region
      %88 = vsyncadd [#allocation11], 0
      %s89 = sshll.u32 %s7, 4
      %s90 = int_to_ptr.hbm [resolvable:$true] %s89
      %s91 = sshll.u32 [#allocation10], 4
      %s92 = int_to_ptr.vmem [resolvable:$true] %s91
      %97 = dma.hbm_to_vmem [thread:$0]  %s90, 4096, %s92, [#allocation11], 128, 128, 8
    $region33: #{generator_batch_forward.1} parent=1 // pred_fallthru
      _
    // Predicated region
    $region34: #{generator_batch_forward.1} parent=1 // pred_check
      _
    $region35: #{generator_batch_forward.1} parent=1 // pred_check_branch
      %99 = sbr.rel (0) target = $region37
    $region36: #{generator_batch_forward.1} parent=1 // pred_region
      _
    $region37: #{generator_batch_forward.1} parent=1 // pred_fallthru
      _
    // Predicated region
    $region38: #{generator_batch_forward.1} parent=1 // pred_check
      _
    $region39: #{generator_batch_forward.1} parent=1 // pred_check_branch
      %101 = sbr.rel (0) target = $region41
    $region40: #{generator_batch_forward.1} parent=1 // pred_region
      %103 = dma.done [#allocation3], 256
    $region41: #{generator_batch_forward.1} parent=1 // pred_fallthru
      _
    // Predicated region
    $region42: #{generator_batch_forward.1} parent=1 // pred_check
      _
    $region43: #{generator_batch_forward.1} parent=1 // pred_check_branch
      %105 = sbr.rel (0) target = $region45
    $region44: #{generator_batch_forward.1} parent=1 // pred_region
      %107 = dma.done [#allocation5], 256
    $region45: #{generator_batch_forward.1} parent=1 // pred_fallthru
      _
    // Predicated region
    $region46: #{generator_batch_forward.1} parent=1 // pred_check
      _
    $region47: #{generator_batch_forward.1} parent=1 // pred_check_branch
      %109 = sbr.rel (0) target = $region49
    $region48: #{generator_batch_forward.1} parent=1 // pred_region
      %111 = dma.done [#allocation5], 512
    $region49: #{generator_batch_forward.1} parent=1 // pred_fallthru
      _
    // Predicated region
    $region50: #{generator_batch_forward.1} parent=1 // pred_check
      _
    $region51: #{generator_batch_forward.1} parent=1 // pred_check_branch
      %113 = sbr.rel (0) target = $region53
    $region52: #{generator_batch_forward.1} parent=1 // pred_region
      %115 = dma.done [#allocation8], 16
    $region53: #{generator_batch_forward.1} parent=1 // pred_fallthru
      _
    // Predicated region
    $region54: #{generator_batch_forward.1} parent=1 // pred_check
      _
    $region55: #{generator_batch_forward.1} parent=1 // pred_check_branch
      %117 = sbr.rel (0) target = $region57
    $region56: #{generator_batch_forward.1} parent=1 // pred_region
      %119 = dma.done [#allocation8], 2048
    $region57: #{generator_batch_forward.1} parent=1 // pred_fallthru
      _
    // Predicated region
    $region58: #{generator_batch_forward.1} parent=1 // pred_check
      _
    $region59: #{generator_batch_forward.1} parent=1 // pred_check_branch
      %121 = sbr.rel (0) target = $region61
    $region60: #{generator_batch_forward.1} parent=1 // pred_region
      %123 = dma.done [#allocation11], 4096
    $region61: #{generator_batch_forward.1} parent=1 // pred_fallthru
      _
    %v124 = vld [vmem:[#allocation2] sm:$0xff]
    %v125 = vld [vmem:[#allocation2 + $0x8] sm:$0xff]
    %v126 = vld [vmem:[#allocation4] sm:$0xff]
    %v127 = vld [vmem:[#allocation4 + $0x8] sm:$0xff]
    %v128 = vld [vmem:[%s2] sm:$0x1]
    %v130 = vperm.slane %v128, 0
    %vm132 = vcmask 130048
    %v134 = vsel %vm132, %v124, 0
    %v137 = vsel %vm132, %v125, 0
    %139 = vmatpush.msra.mxu0 0.0
    %140 = vmatpush.msra.mxu0 0.0
    %141 = vmatpush.msra.mxu0 0.0
    %142 = vmatpush.msra.mxu0 0.0
    %143 = vmatpush.msra.mxu0 0.0
    %144 = vmatpush.msra.mxu0 0.0
    %145 = vmatpush.msra.mxu0 0.0
    %146 = vmatpush.msra.mxu0 0.0
    %147 = vmatpush.msra.mxu0 0.0
    %148 = vmatpush.msra.mxu0 0.0
    %149 = vmatpush.msra.mxu0 0.0
    %150 = vmatpush.msra.mxu0 0.0
    %151 = vmatpush.msra.mxu0 0.0
    %152 = vmatpush.msra.mxu0 0.0
    %153 = vmatpush.msra.mxu0 %v127
    %154 = vmatpush.msra.mxu0 %v126
    %155 = vmatmul.f32.gmra.mxu0 %v134
    %v156 = vpop.f32.mrf.mxu0
    %v157 = vadd.f32 %v130, %v156
    %158 = vmatmul.f32.gmra.mxu0 %v137
    %v159 = vpop.f32.mrf.mxu0
    %v160 = vadd.f32 %v130, %v159
    %161 = vdwg.mxu0
    %v162 = vmax.f32 %v157, 0.0
    %v163 = vmax.f32 %v160, 0.0
    %v164 = vld [vmem:[#allocation6] sm:$0xff]
    %v165 = vld [vmem:[#allocation6 + $0x8] sm:$0xff]
    %v166 = vld [vmem:[#allocation6 + $0x10] sm:$0xff]
    %v167 = vld [vmem:[#allocation6 + $0x18] sm:$0xff]
    %v168 = vld [vmem:[#allocation7] sm:$0x1]
    %v170 = vperm.slane %v168, 0
    %vm172 = vcmask 261120
    %v174 = vsel %vm172, %v162, 0
    %v177 = vsel %vm172, %v163, 0
    %179 = vmatpush.msra.mxu0 0.0
    %180 = vmatpush.msra.mxu0 0.0
    %181 = vmatpush.msra.mxu0 0.0
    %182 = vmatpush.msra.mxu0 0.0
    %183 = vmatpush.msra.mxu0 0.0
    %184 = vmatpush.msra.mxu0 0.0
    %185 = vmatpush.msra.mxu0 0.0
    %186 = vmatpush.msra.mxu0 0.0
    %187 = vmatpush.msra.mxu0 0.0
    %188 = vmatpush.msra.mxu0 0.0
    %189 = vmatpush.msra.mxu0 0.0
    %190 = vmatpush.msra.mxu0 0.0
    %191 = vmatpush.msra.mxu0 %v167
    %192 = vmatpush.msra.mxu0 %v166
    %193 = vmatpush.msra.mxu0 %v165
    %194 = vmatpush.msra.mxu0 %v164
    %195 = vmatmul.f32.gmra.mxu0 %v174
    %v196 = vpop.f32.mrf.mxu0
    %v197 = vadd.f32 %v170, %v196
    %198 = vmatmul.f32.gmra.mxu0 %v177
    %v199 = vpop.f32.mrf.mxu0
    %v200 = vadd.f32 %v170, %v199
    %201 = vdwg.mxu0
    %v202 = vld [vmem:[#allocation9] sm:$0xff]
    %v203 = vld [vmem:[#allocation9 + $0x8] sm:$0xff]
    %v204 = vld [vmem:[#allocation9 + $0x10] sm:$0xff]
    %v205 = vld [vmem:[#allocation9 + $0x18] sm:$0xff]
    %v206 = vld [vmem:[#allocation9 + $0x20] sm:$0xff]
    %v207 = vld [vmem:[#allocation9 + $0x28] sm:$0xff]
    %v208 = vld [vmem:[#allocation9 + $0x30] sm:$0xff]
    %v209 = vld [vmem:[#allocation9 + $0x38] sm:$0xff]
    %v210 = vld [vmem:[#allocation9 + $0x40] sm:$0xff]
    %v211 = vld [vmem:[#allocation9 + $0x48] sm:$0xff]
    %v212 = vld [vmem:[#allocation9 + $0x50] sm:$0xff]
    %v213 = vld [vmem:[#allocation9 + $0x58] sm:$0xff]
    %v214 = vld [vmem:[#allocation9 + $0x60] sm:$0xff]
    %v215 = vld [vmem:[#allocation9 + $0x68] sm:$0xff]
    %v216 = vld [vmem:[#allocation9 + $0x70] sm:$0xff]
    %v217 = vld [vmem:[#allocation9 + $0x78] sm:$0xff]
    %v218 = vld [vmem:[%s6] sm:$0x1]
    %v220 = vrot.slane %v200, 7
    %vm222 = vcmask 1040384
    %v223 = vsel %vm222, %v197, %v220
    %v224 = vadd.f32 %v223, 0.0
    %v225 = vxor.u32 %v224, 2147483648
    %v226 = vmul.f32 %v225, 1.442695
    %v227 = vpow.pop %v226
    %v228 = vadd.f32 %v227, 1.0
    %v229 = vrcp.pop %v228
    %v230 = vmul.f32 %v228, %v229
    %v231 = vsub.f32 1.0, %v230
    %v232 = vmul.f32 %v229, %v231
    %v233 = vadd.f32 %v229, %v232
    %vm234 = vweird.f32 %v228
    %vm235 = vweird.f32 %v229
    %vm236 = vmor %vm234, %vm235
    %v237 = vsel %vm236, %v229, %v233
    %v238 = vand.u32 2147483647, %v228
    %vm239 = vcmp.eq.f32.partialorder %v238, 8.507059e+37
    %v240 = vand.u32 %v228, 2147483648
    %v241 = vor.u32 1.1754944e-38, %v240
    %v242 = vsel %vm239, %v241, %v237
    %v243 = vmul.f32 1.0, %v242
    %v244 = vtanh.pop %v224
    %v245 = vmul.f32 %v243, 0.0
    %247 = vrot.lane.b32.xlu0 %v244, 32
    %v248 = vpop.permute.xlu0 %247
    %v250 = vmul.f32 %v243, %v248
    %252 = vrot.lane.b32.xlu0 %v250, 32
    %v253 = vpop.permute.xlu0 %252
    %v255 = vadd.f32 %v245, %v253
    %v256 = vtanh.pop %v255
    %258 = vrot.lane.b32.xlu0 %v256, 32
    %v259 = vpop.permute.xlu0 %258
    %v261 = vmul.f32 %v243, %v259
    %263 = vrot.lane.b32.xlu0 %v261, 64
    %v264 = vpop.permute.xlu0 %263
    %v266 = vsel %vm172, %v264, 0.0
    %vm267 = vcmask 523264
    %v269 = vsel %vm267, %v266, 0
    %271 = vmatpush.msra.mxu0 0.0
    %272 = vmatpush.msra.mxu0 0.0
    %273 = vmatpush.msra.mxu0 0.0
    %274 = vmatpush.msra.mxu0 0.0
    %275 = vmatpush.msra.mxu0 0.0
    %276 = vmatpush.msra.mxu0 0.0
    %277 = vmatpush.msra.mxu0 0.0
    %278 = vmatpush.msra.mxu0 0.0
    %279 = vmatpush.msra.mxu0 %v216
    %280 = vmatpush.msra.mxu0 %v214
    %281 = vmatpush.msra.mxu0 %v212
    %282 = vmatpush.msra.mxu0 %v210
    %283 = vmatpush.msra.mxu0 %v208
    %284 = vmatpush.msra.mxu0 %v206
    %285 = vmatpush.msra.mxu0 %v204
    %286 = vmatpush.msra.mxu0 %v202
    %287 = vmatmul.f32.gmra.mxu0 %v269
    %v288 = vpop.f32.mrf.mxu0
    %v289 = vadd.f32 0.0, %v288
    %290 = vdwg.mxu0
    %291 = vmatpush.msra.mxu0 0.0
    %292 = vmatpush.msra.mxu0 0.0
    %293 = vmatpush.msra.mxu0 0.0
    %294 = vmatpush.msra.mxu0 0.0
    %295 = vmatpush.msra.mxu0 0.0
    %296 = vmatpush.msra.mxu0 0.0
    %297 = vmatpush.msra.mxu0 0.0
    %298 = vmatpush.msra.mxu0 0.0
    %299 = vmatpush.msra.mxu0 %v217
    %300 = vmatpush.msra.mxu0 %v215
    %301 = vmatpush.msra.mxu0 %v213
    %302 = vmatpush.msra.mxu0 %v211
    %303 = vmatpush.msra.mxu0 %v209
    %304 = vmatpush.msra.mxu0 %v207
    %305 = vmatpush.msra.mxu0 %v205
    %306 = vmatpush.msra.mxu0 %v203
    %307 = vmatmul.f32.gmra.mxu0 %v269
    %v308 = vpop.f32.mrf.mxu0
    %v309 = vadd.f32 0.0, %v308
    %310 = vdwg.mxu0
    %v312 = vperm.slane %v218, 0
    %v314 = vadd.f32 %v289, %v312
    %v315 = vxor.u32 %v314, 2147483648
    %v316 = vmul.f32 %v315, 1.442695
    %v317 = vpow.pop %v316
    %v318 = vadd.f32 %v317, 1.0
    %v319 = vrcp.pop %v318
    %v320 = vmul.f32 %v318, %v319
    %v321 = vsub.f32 1.0, %v320
    %v322 = vmul.f32 %v319, %v321
    %v323 = vadd.f32 %v319, %v322
    %vm324 = vweird.f32 %v318
    %vm325 = vweird.f32 %v319
    %vm326 = vmor %vm324, %vm325
    %v327 = vsel %vm326, %v319, %v323
    %v328 = vand.u32 2147483647, %v318
    %vm329 = vcmp.eq.f32.partialorder %v328, 8.507059e+37
    %v330 = vand.u32 %v318, 2147483648
    %v331 = vor.u32 1.1754944e-38, %v330
    %v332 = vsel %vm329, %v331, %v327
    %v333 = vmul.f32 1.0, %v332
    %v334 = vtanh.pop %v314
    %v335 = vmul.f32 %v333, 0.0
    %337 = vrot.lane.b32.xlu0 %v334, 32
    %v338 = vpop.permute.xlu0 %337
    %v340 = vmul.f32 %v333, %v338
    %342 = vrot.lane.b32.xlu0 %v340, 32
    %v343 = vpop.permute.xlu0 %342
    %v345 = vadd.f32 %v335, %v343
    %v346 = vtanh.pop %v345
    %348 = vrot.lane.b32.xlu0 %v346, 32
    %v349 = vpop.permute.xlu0 %348
    %v351 = vmul.f32 %v333, %v349
    %v353 = vrot.slane %v197, 1
    %v355 = vsel %vm222, %v353, %v200
    %v356 = vadd.f32 %v355, %v309
    %v357 = vxor.u32 %v356, 2147483648
    %v358 = vmul.f32 %v357, 1.442695
    %v359 = vpow.pop %v358
    %v360 = vadd.f32 %v359, 1.0
    %v361 = vrcp.pop %v360
    %v362 = vmul.f32 %v360, %v361
    %v363 = vsub.f32 1.0, %v362
    %v364 = vmul.f32 %v361, %v363
    %v365 = vadd.f32 %v361, %v364
    %vm366 = vweird.f32 %v360
    %vm367 = vweird.f32 %v361
    %vm368 = vmor %vm366, %vm367
    %v369 = vsel %vm368, %v361, %v365
    %v370 = vand.u32 2147483647, %v360
    %vm371 = vcmp.eq.f32.partialorder %v370, 8.507059e+37
    %v372 = vand.u32 %v360, 2147483648
    %v373 = vor.u32 1.1754944e-38, %v372
    %v374 = vsel %vm371, %v373, %v369
    %v375 = vmul.f32 1.0, %v374
    %v376 = vtanh.pop %v356
    %v377 = vmul.f32 %v375, %v255
    %379 = vrot.lane.b32.xlu0 %v376, 32
    %v380 = vpop.permute.xlu0 %379
    %v382 = vmul.f32 %v375, %v380
    %384 = vrot.lane.b32.xlu0 %v382, 32
    %v385 = vpop.permute.xlu0 %384
    %v387 = vadd.f32 %v377, %v385
    %v388 = vtanh.pop %v387
    %390 = vrot.lane.b32.xlu0 %v388, 32
    %v391 = vpop.permute.xlu0 %390
    %v393 = vmul.f32 %v375, %v391
    %395 = vrot.lane.b32.xlu0 %v393, 64
    %v396 = vpop.permute.xlu0 %395
    %399 = vrot.lane.b32.xlu0 %v351, 96
    %v400 = vpop.permute.xlu0 %399
    %v402 = vsel %vm172, %v396, %v400
    %v404 = vsel %vm267, %v402, 0
    %406 = vmatpush.msra.mxu0 0.0
    %407 = vmatpush.msra.mxu0 0.0
    %408 = vmatpush.msra.mxu0 0.0
    %409 = vmatpush.msra.mxu0 0.0
    %410 = vmatpush.msra.mxu0 0.0
    %411 = vmatpush.msra.mxu0 0.0
    %412 = vmatpush.msra.mxu0 0.0
    %413 = vmatpush.msra.mxu0 0.0
    %414 = vmatpush.msra.mxu0 %v216
    %415 = vmatpush.msra.mxu0 %v214
    %416 = vmatpush.msra.mxu0 %v212
    %417 = vmatpush.msra.mxu0 %v210
    %418 = vmatpush.msra.mxu0 %v208
    %419 = vmatpush.msra.mxu0 %v206
    %420 = vmatpush.msra.mxu0 %v204
    %421 = vmatpush.msra.mxu0 %v202
    %422 = vmatmul.f32.gmra.mxu0 %v404
    %v423 = vpop.f32.mrf.mxu0
    %v424 = vadd.f32 0.0, %v423
    %425 = vdwg.mxu0
    %426 = vmatpush.msra.mxu0 0.0
    %427 = vmatpush.msra.mxu0 0.0
    %428 = vmatpush.msra.mxu0 0.0
    %429 = vmatpush.msra.mxu0 0.0
    %430 = vmatpush.msra.mxu0 0.0
    %431 = vmatpush.msra.mxu0 0.0
    %432 = vmatpush.msra.mxu0 0.0
    %433 = vmatpush.msra.mxu0 0.0
    %434 = vmatpush.msra.mxu0 %v217
    %435 = vmatpush.msra.mxu0 %v215
    %436 = vmatpush.msra.mxu0 %v213
    %437 = vmatpush.msra.mxu0 %v211
    %438 = vmatpush.msra.mxu0 %v209
    %439 = vmatpush.msra.mxu0 %v207
    %440 = vmatpush.msra.mxu0 %v205
    %441 = vmatpush.msra.mxu0 %v203
    %442 = vmatmul.f32.gmra.mxu0 %v404
    %v443 = vpop.f32.mrf.mxu0
    %v444 = vadd.f32 0.0, %v443
    %445 = vdwg.mxu0
    %v446 = vadd.f32 %v424, %v312
    %v447 = vxor.u32 %v446, 2147483648
    %v448 = vmul.f32 %v447, 1.442695
    %v449 = vpow.pop %v448
    %v450 = vadd.f32 %v449, 1.0
    %v451 = vrcp.pop %v450
    %v452 = vmul.f32 %v450, %v451
    %v453 = vsub.f32 1.0, %v452
    %v454 = vmul.f32 %v451, %v453
    %v455 = vadd.f32 %v451, %v454
    %vm456 = vweird.f32 %v450
    %vm457 = vweird.f32 %v451
    %vm458 = vmor %vm456, %vm457
    %v459 = vsel %vm458, %v451, %v455
    %v460 = vand.u32 2147483647, %v450
    %vm461 = vcmp.eq.f32.partialorder %v460, 8.507059e+37
    %v462 = vand.u32 %v450, 2147483648
    %v463 = vor.u32 1.1754944e-38, %v462
    %v464 = vsel %vm461, %v463, %v459
    %v465 = vmul.f32 1.0, %v464
    %v466 = vtanh.pop %v446
    %v467 = vmul.f32 %v465, %v345
    %469 = vrot.lane.b32.xlu0 %v466, 32
    %v470 = vpop.permute.xlu0 %469
    %v472 = vmul.f32 %v465, %v470
    %474 = vrot.lane.b32.xlu0 %v472, 32
    %v475 = vpop.permute.xlu0 %474
    %v477 = vadd.f32 %v467, %v475
    %v478 = vtanh.pop %v477
    %480 = vrot.lane.b32.xlu0 %v478, 32
    %v481 = vpop.permute.xlu0 %480
    %v483 = vmul.f32 %v465, %v481
    %v484 = vrot.slane %v197, 2
    %v486 = vrot.slane %v200, 1
    %v488 = vsel %vm222, %v484, %v486
    %v489 = vadd.f32 %v488, %v444
    %v490 = vxor.u32 %v489, 2147483648
    %v491 = vmul.f32 %v490, 1.442695
    %v492 = vpow.pop %v491
    %v493 = vadd.f32 %v492, 1.0
    %v494 = vrcp.pop %v493
    %v495 = vmul.f32 %v493, %v494
    %v496 = vsub.f32 1.0, %v495
    %v497 = vmul.f32 %v494, %v496
    %v498 = vadd.f32 %v494, %v497
    %vm499 = vweird.f32 %v493
    %vm500 = vweird.f32 %v494
    %vm501 = vmor %vm499, %vm500
    %v502 = vsel %vm501, %v494, %v498
    %v503 = vand.u32 2147483647, %v493
    %vm504 = vcmp.eq.f32.partialorder %v503, 8.507059e+37
    %v505 = vand.u32 %v493, 2147483648
    %v506 = vor.u32 1.1754944e-38, %v505
    %v507 = vsel %vm504, %v506, %v502
    %v508 = vmul.f32 1.0, %v507
    %v509 = vtanh.pop %v489
    %v510 = vmul.f32 %v508, %v387
    %512 = vrot.lane.b32.xlu0 %v509, 32
    %v513 = vpop.permute.xlu0 %512
    %v515 = vmul.f32 %v508, %v513
    %517 = vrot.lane.b32.xlu0 %v515, 32
    %v518 = vpop.permute.xlu0 %517
    %v520 = vadd.f32 %v510, %v518
    %v521 = vtanh.pop %v520
    %523 = vrot.lane.b32.xlu0 %v521, 32
    %v524 = vpop.permute.xlu0 %523
    %v526 = vmul.f32 %v508, %v524
    %528 = vrot.lane.b32.xlu0 %v526, 64
    %v529 = vpop.permute.xlu0 %528
    %532 = vrot.lane.b32.xlu0 %v483, 96
    %v533 = vpop.permute.xlu0 %532
    %v535 = vsel %vm172, %v529, %v533
    %v537 = vsel %vm267, %v535, 0
    %539 = vmatpush.msra.mxu0 0.0
    %540 = vmatpush.msra.mxu0 0.0
    %541 = vmatpush.msra.mxu0 0.0
    %542 = vmatpush.msra.mxu0 0.0
    %543 = vmatpush.msra.mxu0 0.0
    %544 = vmatpush.msra.mxu0 0.0
    %545 = vmatpush.msra.mxu0 0.0
    %546 = vmatpush.msra.mxu0 0.0
    %547 = vmatpush.msra.mxu0 %v216
    %548 = vmatpush.msra.mxu0 %v214
    %549 = vmatpush.msra.mxu0 %v212
    %550 = vmatpush.msra.mxu0 %v210
    %551 = vmatpush.msra.mxu0 %v208
    %552 = vmatpush.msra.mxu0 %v206
    %553 = vmatpush.msra.mxu0 %v204
    %554 = vmatpush.msra.mxu0 %v202
    %555 = vmatmul.f32.gmra.mxu0 %v537
    %v556 = vpop.f32.mrf.mxu0
    %v557 = vadd.f32 0.0, %v556
    %558 = vdwg.mxu0
    %559 = vmatpush.msra.mxu0 0.0
    %560 = vmatpush.msra.mxu0 0.0
    %561 = vmatpush.msra.mxu0 0.0
    %562 = vmatpush.msra.mxu0 0.0
    %563 = vmatpush.msra.mxu0 0.0
    %564 = vmatpush.msra.mxu0 0.0
    %565 = vmatpush.msra.mxu0 0.0
    %566 = vmatpush.msra.mxu0 0.0
    %567 = vmatpush.msra.mxu0 %v217
    %568 = vmatpush.msra.mxu0 %v215
    %569 = vmatpush.msra.mxu0 %v213
    %570 = vmatpush.msra.mxu0 %v211
    %571 = vmatpush.msra.mxu0 %v209
    %572 = vmatpush.msra.mxu0 %v207
    %573 = vmatpush.msra.mxu0 %v205
    %574 = vmatpush.msra.mxu0 %v203
    %575 = vmatmul.f32.gmra.mxu0 %v537
    %v576 = vpop.f32.mrf.mxu0
    %v577 = vadd.f32 0.0, %v576
    %578 = vdwg.mxu0
    %v579 = vadd.f32 %v557, %v312
    %v580 = vxor.u32 %v579, 2147483648
    %v581 = vmul.f32 %v580, 1.442695
    %v582 = vpow.pop %v581
    %v583 = vadd.f32 %v582, 1.0
    %v584 = vrcp.pop %v583
    %v585 = vmul.f32 %v583, %v584
    %v586 = vsub.f32 1.0, %v585
    %v587 = vmul.f32 %v584, %v586
    %v588 = vadd.f32 %v584, %v587
    %vm589 = vweird.f32 %v583
    %vm590 = vweird.f32 %v584
    %vm591 = vmor %vm589, %vm590
    %v592 = vsel %vm591, %v584, %v588
    %v593 = vand.u32 2147483647, %v583
    %vm594 = vcmp.eq.f32.partialorder %v593, 8.507059e+37
    %v595 = vand.u32 %v583, 2147483648
    %v596 = vor.u32 1.1754944e-38, %v595
    %v597 = vsel %vm594, %v596, %v592
    %v598 = vmul.f32 1.0, %v597
    %v599 = vtanh.pop %v579
    %v600 = vmul.f32 %v598, %v477
    %602 = vrot.lane.b32.xlu0 %v599, 32
    %v603 = vpop.permute.xlu0 %602
    %v605 = vmul.f32 %v598, %v603
    %607 = vrot.lane.b32.xlu0 %v605, 32
    %v608 = vpop.permute.xlu0 %607
    %v610 = vadd.f32 %v600, %v608
    %v611 = vtanh.pop %v610
    %613 = vrot.lane.b32.xlu0 %v611, 32
    %v614 = vpop.permute.xlu0 %613
    %v616 = vmul.f32 %v598, %v614
    %v617 = vrot.slane %v197, 3
    %v619 = vrot.slane %v200, 2
    %v621 = vsel %vm222, %v617, %v619
    %v622 = vadd.f32 %v621, %v577
    %v623 = vxor.u32 %v622, 2147483648
    %v624 = vmul.f32 %v623, 1.442695
    %v625 = vpow.pop %v624
    %v626 = vadd.f32 %v625, 1.0
    %v627 = vrcp.pop %v626
    %v628 = vmul.f32 %v626, %v627
    %v629 = vsub.f32 1.0, %v628
    %v630 = vmul.f32 %v627, %v629
    %v631 = vadd.f32 %v627, %v630
    %vm632 = vweird.f32 %v626
    %vm633 = vweird.f32 %v627
    %vm634 = vmor %vm632, %vm633
    %v635 = vsel %vm634, %v627, %v631
    %v636 = vand.u32 2147483647, %v626
    %vm637 = vcmp.eq.f32.partialorder %v636, 8.507059e+37
    %v638 = vand.u32 %v626, 2147483648
    %v639 = vor.u32 1.1754944e-38, %v638
    %v640 = vsel %vm637, %v639, %v635
    %v641 = vmul.f32 1.0, %v640
    %v642 = vtanh.pop %v622
    %v643 = vmul.f32 %v641, %v520
    %645 = vrot.lane.b32.xlu0 %v642, 32
    %v646 = vpop.permute.xlu0 %645
    %v648 = vmul.f32 %v641, %v646
    %650 = vrot.lane.b32.xlu0 %v648, 32
    %v651 = vpop.permute.xlu0 %650
    %v653 = vadd.f32 %v643, %v651
    %v654 = vtanh.pop %v653
    %656 = vrot.lane.b32.xlu0 %v654, 32
    %v657 = vpop.permute.xlu0 %656
    %v659 = vmul.f32 %v641, %v657
    %661 = vrot.lane.b32.xlu0 %v659, 64
    %v662 = vpop.permute.xlu0 %661
    %665 = vrot.lane.b32.xlu0 %v616, 96
    %v666 = vpop.permute.xlu0 %665
    %v668 = vsel %vm172, %v662, %v666
    %v670 = vsel %vm267, %v668, 0
    %672 = vmatpush.msra.mxu0 0.0
    %673 = vmatpush.msra.mxu0 0.0
    %674 = vmatpush.msra.mxu0 0.0
    %675 = vmatpush.msra.mxu0 0.0
    %676 = vmatpush.msra.mxu0 0.0
    %677 = vmatpush.msra.mxu0 0.0
    %678 = vmatpush.msra.mxu0 0.0
    %679 = vmatpush.msra.mxu0 0.0
    %680 = vmatpush.msra.mxu0 %v216
    %681 = vmatpush.msra.mxu0 %v214
    %682 = vmatpush.msra.mxu0 %v212
    %683 = vmatpush.msra.mxu0 %v210
    %684 = vmatpush.msra.mxu0 %v208
    %685 = vmatpush.msra.mxu0 %v206
    %686 = vmatpush.msra.mxu0 %v204
    %687 = vmatpush.msra.mxu0 %v202
    %688 = vmatmul.f32.gmra.mxu0 %v670
    %v689 = vpop.f32.mrf.mxu0
    %v690 = vadd.f32 0.0, %v689
    %691 = vdwg.mxu0
    %692 = vmatpush.msra.mxu0 0.0
    %693 = vmatpush.msra.mxu0 0.0
    %694 = vmatpush.msra.mxu0 0.0
    %695 = vmatpush.msra.mxu0 0.0
    %696 = vmatpush.msra.mxu0 0.0
    %697 = vmatpush.msra.mxu0 0.0
    %698 = vmatpush.msra.mxu0 0.0
    %699 = vmatpush.msra.mxu0 0.0
    %700 = vmatpush.msra.mxu0 %v217
    %701 = vmatpush.msra.mxu0 %v215
    %702 = vmatpush.msra.mxu0 %v213
    %703 = vmatpush.msra.mxu0 %v211
    %704 = vmatpush.msra.mxu0 %v209
    %705 = vmatpush.msra.mxu0 %v207
    %706 = vmatpush.msra.mxu0 %v205
    %707 = vmatpush.msra.mxu0 %v203
    %708 = vmatmul.f32.gmra.mxu0 %v670
    %v709 = vpop.f32.mrf.mxu0
    %v710 = vadd.f32 0.0, %v709
    %711 = vdwg.mxu0
    %v712 = vadd.f32 %v690, %v312
    %v713 = vxor.u32 %v712, 2147483648
    %v714 = vmul.f32 %v713, 1.442695
    %v715 = vpow.pop %v714
    %v716 = vadd.f32 %v715, 1.0
    %v717 = vrcp.pop %v716
    %v718 = vmul.f32 %v716, %v717
    %v719 = vsub.f32 1.0, %v718
    %v720 = vmul.f32 %v717, %v719
    %v721 = vadd.f32 %v717, %v720
    %vm722 = vweird.f32 %v716
    %vm723 = vweird.f32 %v717
    %vm724 = vmor %vm722, %vm723
    %v725 = vsel %vm724, %v717, %v721
    %v726 = vand.u32 2147483647, %v716
    %vm727 = vcmp.eq.f32.partialorder %v726, 8.507059e+37
    %v728 = vand.u32 %v716, 2147483648
    %v729 = vor.u32 1.1754944e-38, %v728
    %v730 = vsel %vm727, %v729, %v725
    %v731 = vmul.f32 1.0, %v730
    %v732 = vtanh.pop %v712
    %v733 = vmul.f32 %v731, %v610
    %735 = vrot.lane.b32.xlu0 %v732, 32
    %v736 = vpop.permute.xlu0 %735
    %v738 = vmul.f32 %v731, %v736
    %740 = vrot.lane.b32.xlu0 %v738, 32
    %v741 = vpop.permute.xlu0 %740
    %v743 = vadd.f32 %v733, %v741
    %v744 = vtanh.pop %v743
    %746 = vrot.lane.b32.xlu0 %v744, 32
    %v747 = vpop.permute.xlu0 %746
    %v749 = vmul.f32 %v731, %v747
    %v750 = vrot.slane %v197, 4
    %v752 = vrot.slane %v200, 3
    %v754 = vsel %vm222, %v750, %v752
    %v755 = vadd.f32 %v754, %v710
    %v756 = vxor.u32 %v755, 2147483648
    %v757 = vmul.f32 %v756, 1.442695
    %v758 = vpow.pop %v757
    %v759 = vadd.f32 %v758, 1.0
    %v760 = vrcp.pop %v759
    %v761 = vmul.f32 %v759, %v760
    %v762 = vsub.f32 1.0, %v761
    %v763 = vmul.f32 %v760, %v762
    %v764 = vadd.f32 %v760, %v763
    %vm765 = vweird.f32 %v759
    %vm766 = vweird.f32 %v760
    %vm767 = vmor %vm765, %vm766
    %v768 = vsel %vm767, %v760, %v764
    %v769 = vand.u32 2147483647, %v759
    %vm770 = vcmp.eq.f32.partialorder %v769, 8.507059e+37
    %v771 = vand.u32 %v759, 2147483648
    %v772 = vor.u32 1.1754944e-38, %v771
    %v773 = vsel %vm770, %v772, %v768
    %v774 = vmul.f32 1.0, %v773
    %v775 = vtanh.pop %v755
    %v776 = vmul.f32 %v774, %v653
    %778 = vrot.lane.b32.xlu0 %v775, 32
    %v779 = vpop.permute.xlu0 %778
    %v781 = vmul.f32 %v774, %v779
    %783 = vrot.lane.b32.xlu0 %v781, 32
    %v784 = vpop.permute.xlu0 %783
    %v786 = vadd.f32 %v776, %v784
    %v787 = vtanh.pop %v786
    %789 = vrot.lane.b32.xlu0 %v787, 32
    %v790 = vpop.permute.xlu0 %789
    %v792 = vmul.f32 %v774, %v790
    %794 = vrot.lane.b32.xlu0 %v792, 64
    %v795 = vpop.permute.xlu0 %794
    %798 = vrot.lane.b32.xlu0 %v749, 96
    %v799 = vpop.permute.xlu0 %798
    %v801 = vsel %vm172, %v795, %v799
    %v803 = vsel %vm267, %v801, 0
    %805 = vmatpush.msra.mxu0 0.0
    %806 = vmatpush.msra.mxu0 0.0
    %807 = vmatpush.msra.mxu0 0.0
    %808 = vmatpush.msra.mxu0 0.0
    %809 = vmatpush.msra.mxu0 0.0
    %810 = vmatpush.msra.mxu0 0.0
    %811 = vmatpush.msra.mxu0 0.0
    %812 = vmatpush.msra.mxu0 0.0
    %813 = vmatpush.msra.mxu0 %v216
    %814 = vmatpush.msra.mxu0 %v214
    %815 = vmatpush.msra.mxu0 %v212
    %816 = vmatpush.msra.mxu0 %v210
    %817 = vmatpush.msra.mxu0 %v208
    %818 = vmatpush.msra.mxu0 %v206
    %819 = vmatpush.msra.mxu0 %v204
    %820 = vmatpush.msra.mxu0 %v202
    %821 = vmatmul.f32.gmra.mxu0 %v803
    %v822 = vpop.f32.mrf.mxu0
    %v823 = vadd.f32 0.0, %v822
    %824 = vdwg.mxu0
    %825 = vmatpush.msra.mxu0 0.0
    %826 = vmatpush.msra.mxu0 0.0
    %827 = vmatpush.msra.mxu0 0.0
    %828 = vmatpush.msra.mxu0 0.0
    %829 = vmatpush.msra.mxu0 0.0
    %830 = vmatpush.msra.mxu0 0.0
    %831 = vmatpush.msra.mxu0 0.0
    %832 = vmatpush.msra.mxu0 0.0
    %833 = vmatpush.msra.mxu0 %v217
    %834 = vmatpush.msra.mxu0 %v215
    %835 = vmatpush.msra.mxu0 %v213
    %836 = vmatpush.msra.mxu0 %v211
    %837 = vmatpush.msra.mxu0 %v209
    %838 = vmatpush.msra.mxu0 %v207
    %839 = vmatpush.msra.mxu0 %v205
    %840 = vmatpush.msra.mxu0 %v203
    %841 = vmatmul.f32.gmra.mxu0 %v803
    %v842 = vpop.f32.mrf.mxu0
    %v843 = vadd.f32 0.0, %v842
    %844 = vdwg.mxu0
    %v845 = vadd.f32 %v823, %v312
    %v846 = vxor.u32 %v845, 2147483648
    %v847 = vmul.f32 %v846, 1.442695
    %v848 = vpow.pop %v847
    %v849 = vadd.f32 %v848, 1.0
    %v850 = vrcp.pop %v849
    %v851 = vmul.f32 %v849, %v850
    %v852 = vsub.f32 1.0, %v851
    %v853 = vmul.f32 %v850, %v852
    %v854 = vadd.f32 %v850, %v853
    %vm855 = vweird.f32 %v849
    %vm856 = vweird.f32 %v850
    %vm857 = vmor %vm855, %vm856
    %v858 = vsel %vm857, %v850, %v854
    %v859 = vand.u32 2147483647, %v849
    %vm860 = vcmp.eq.f32.partialorder %v859, 8.507059e+37
    %v861 = vand.u32 %v849, 2147483648
    %v862 = vor.u32 1.1754944e-38, %v861
    %v863 = vsel %vm860, %v862, %v858
    %v864 = vmul.f32 1.0, %v863
    %v865 = vtanh.pop %v845
    %v866 = vmul.f32 %v864, %v743
    %868 = vrot.lane.b32.xlu0 %v865, 32
    %v869 = vpop.permute.xlu0 %868
    %v871 = vmul.f32 %v864, %v869
    %873 = vrot.lane.b32.xlu0 %v871, 32
    %v874 = vpop.permute.xlu0 %873
    %v876 = vadd.f32 %v866, %v874
    %v877 = vtanh.pop %v876
    %879 = vrot.lane.b32.xlu0 %v877, 32
    %v880 = vpop.permute.xlu0 %879
    %v882 = vmul.f32 %v864, %v880
    %v883 = vrot.slane %v197, 5
    %v885 = vrot.slane %v200, 4
    %v887 = vsel %vm222, %v883, %v885
    %v888 = vadd.f32 %v887, %v843
    %v889 = vxor.u32 %v888, 2147483648
    %v890 = vmul.f32 %v889, 1.442695
    %v891 = vpow.pop %v890
    %v892 = vadd.f32 %v891, 1.0
    %v893 = vrcp.pop %v892
    %v894 = vmul.f32 %v892, %v893
    %v895 = vsub.f32 1.0, %v894
    %v896 = vmul.f32 %v893, %v895
    %v897 = vadd.f32 %v893, %v896
    %vm898 = vweird.f32 %v892
    %vm899 = vweird.f32 %v893
    %vm900 = vmor %vm898, %vm899
    %v901 = vsel %vm900, %v893, %v897
    %v902 = vand.u32 2147483647, %v892
    %vm903 = vcmp.eq.f32.partialorder %v902, 8.507059e+37
    %v904 = vand.u32 %v892, 2147483648
    %v905 = vor.u32 1.1754944e-38, %v904
    %v906 = vsel %vm903, %v905, %v901
    %v907 = vmul.f32 1.0, %v906
    %v908 = vtanh.pop %v888
    %v909 = vmul.f32 %v907, %v786
    %911 = vrot.lane.b32.xlu0 %v908, 32
    %v912 = vpop.permute.xlu0 %911
    %v914 = vmul.f32 %v907, %v912
    %916 = vrot.lane.b32.xlu0 %v914, 32
    %v917 = vpop.permute.xlu0 %916
    %v919 = vadd.f32 %v909, %v917
    %v920 = vtanh.pop %v919
    %922 = vrot.lane.b32.xlu0 %v920, 32
    %v923 = vpop.permute.xlu0 %922
    %v925 = vmul.f32 %v907, %v923
    %927 = vrot.lane.b32.xlu0 %v925, 64
    %v928 = vpop.permute.xlu0 %927
    %931 = vrot.lane.b32.xlu0 %v882, 96
    %v932 = vpop.permute.xlu0 %931
    %v934 = vsel %vm172, %v928, %v932
    %v936 = vsel %vm267, %v934, 0
    %938 = vmatpush.msra.mxu0 0.0
    %939 = vmatpush.msra.mxu0 0.0
    %940 = vmatpush.msra.mxu0 0.0
    %941 = vmatpush.msra.mxu0 0.0
    %942 = vmatpush.msra.mxu0 0.0
    %943 = vmatpush.msra.mxu0 0.0
    %944 = vmatpush.msra.mxu0 0.0
    %945 = vmatpush.msra.mxu0 0.0
    %946 = vmatpush.msra.mxu0 %v216
    %947 = vmatpush.msra.mxu0 %v214
    %948 = vmatpush.msra.mxu0 %v212
    %949 = vmatpush.msra.mxu0 %v210
    %950 = vmatpush.msra.mxu0 %v208
    %951 = vmatpush.msra.mxu0 %v206
    %952 = vmatpush.msra.mxu0 %v204
    %953 = vmatpush.msra.mxu0 %v202
    %954 = vmatmul.f32.gmra.mxu0 %v936
    %v955 = vpop.f32.mrf.mxu0
    %v956 = vadd.f32 0.0, %v955
    %957 = vdwg.mxu0
    %958 = vmatpush.msra.mxu0 0.0
    %959 = vmatpush.msra.mxu0 0.0
    %960 = vmatpush.msra.mxu0 0.0
    %961 = vmatpush.msra.mxu0 0.0
    %962 = vmatpush.msra.mxu0 0.0
    %963 = vmatpush.msra.mxu0 0.0
    %964 = vmatpush.msra.mxu0 0.0
    %965 = vmatpush.msra.mxu0 0.0
    %966 = vmatpush.msra.mxu0 %v217
    %967 = vmatpush.msra.mxu0 %v215
    %968 = vmatpush.msra.mxu0 %v213
    %969 = vmatpush.msra.mxu0 %v211
    %970 = vmatpush.msra.mxu0 %v209
    %971 = vmatpush.msra.mxu0 %v207
    %972 = vmatpush.msra.mxu0 %v205
    %973 = vmatpush.msra.mxu0 %v203
    %974 = vmatmul.f32.gmra.mxu0 %v936
    %v975 = vpop.f32.mrf.mxu0
    %v976 = vadd.f32 0.0, %v975
    %977 = vdwg.mxu0
    %v978 = vadd.f32 %v956, %v312
    %v979 = vxor.u32 %v978, 2147483648
    %v980 = vmul.f32 %v979, 1.442695
    %v981 = vpow.pop %v980
    %v982 = vadd.f32 %v981, 1.0
    %v983 = vrcp.pop %v982
    %v984 = vmul.f32 %v982, %v983
    %v985 = vsub.f32 1.0, %v984
    %v986 = vmul.f32 %v983, %v985
    %v987 = vadd.f32 %v983, %v986
    %vm988 = vweird.f32 %v982
    %vm989 = vweird.f32 %v983
    %vm990 = vmor %vm988, %vm989
    %v991 = vsel %vm990, %v983, %v987
    %v992 = vand.u32 2147483647, %v982
    %vm993 = vcmp.eq.f32.partialorder %v992, 8.507059e+37
    %v994 = vand.u32 %v982, 2147483648
    %v995 = vor.u32 1.1754944e-38, %v994
    %v996 = vsel %vm993, %v995, %v991
    %v997 = vmul.f32 1.0, %v996
    %v998 = vtanh.pop %v978
    %v999 = vmul.f32 %v997, %v876
    %1001 = vrot.lane.b32.xlu0 %v998, 32
    %v1002 = vpop.permute.xlu0 %1001
    %v1004 = vmul.f32 %v997, %v1002
    %1006 = vrot.lane.b32.xlu0 %v1004, 32
    %v1007 = vpop.permute.xlu0 %1006
    %v1009 = vadd.f32 %v999, %v1007
    %v1010 = vtanh.pop %v1009
    %1012 = vrot.lane.b32.xlu0 %v1010, 32
    %v1013 = vpop.permute.xlu0 %1012
    %v1015 = vmul.f32 %v997, %v1013
    %v1016 = vrot.slane %v197, 6
    %v1018 = vrot.slane %v200, 5
    %v1020 = vsel %vm222, %v1016, %v1018
    %v1021 = vadd.f32 %v1020, %v976
    %v1022 = vxor.u32 %v1021, 2147483648
    %v1023 = vmul.f32 %v1022, 1.442695
    %v1024 = vpow.pop %v1023
    %v1025 = vadd.f32 %v1024, 1.0
    %v1026 = vrcp.pop %v1025
    %v1027 = vmul.f32 %v1025, %v1026
    %v1028 = vsub.f32 1.0, %v1027
    %v1029 = vmul.f32 %v1026, %v1028
    %v1030 = vadd.f32 %v1026, %v1029
    %vm1031 = vweird.f32 %v1025
    %vm1032 = vweird.f32 %v1026
    %vm1033 = vmor %vm1031, %vm1032
    %v1034 = vsel %vm1033, %v1026, %v1030
    %v1035 = vand.u32 2147483647, %v1025
    %vm1036 = vcmp.eq.f32.partialorder %v1035, 8.507059e+37
    %v1037 = vand.u32 %v1025, 2147483648
    %v1038 = vor.u32 1.1754944e-38, %v1037
    %v1039 = vsel %vm1036, %v1038, %v1034
    %v1040 = vmul.f32 1.0, %v1039
    %v1041 = vtanh.pop %v1021
    %v1042 = vmul.f32 %v1040, %v919
    %1044 = vrot.lane.b32.xlu0 %v1041, 32
    %v1045 = vpop.permute.xlu0 %1044
    %v1047 = vmul.f32 %v1040, %v1045
    %1049 = vrot.lane.b32.xlu0 %v1047, 32
    %v1050 = vpop.permute.xlu0 %1049
    %v1052 = vadd.f32 %v1042, %v1050
    %v1053 = vtanh.pop %v1052
    %1055 = vrot.lane.b32.xlu0 %v1053, 32
    %v1056 = vpop.permute.xlu0 %1055
    %v1058 = vmul.f32 %v1040, %v1056
    %1060 = vrot.lane.b32.xlu0 %v1058, 64
    %v1061 = vpop.permute.xlu0 %1060
    %1064 = vrot.lane.b32.xlu0 %v1015, 96
    %v1065 = vpop.permute.xlu0 %1064
    %v1067 = vsel %vm172, %v1061, %v1065
    %v1069 = vsel %vm267, %v1067, 0
    %1071 = vmatpush.msra.mxu0 0.0
    %1072 = vmatpush.msra.mxu0 0.0
    %1073 = vmatpush.msra.mxu0 0.0
    %1074 = vmatpush.msra.mxu0 0.0
    %1075 = vmatpush.msra.mxu0 0.0
    %1076 = vmatpush.msra.mxu0 0.0
    %1077 = vmatpush.msra.mxu0 0.0
    %1078 = vmatpush.msra.mxu0 0.0
    %1079 = vmatpush.msra.mxu0 %v216
    %1080 = vmatpush.msra.mxu0 %v214
    %1081 = vmatpush.msra.mxu0 %v212
    %1082 = vmatpush.msra.mxu0 %v210
    %1083 = vmatpush.msra.mxu0 %v208
    %1084 = vmatpush.msra.mxu0 %v206
    %1085 = vmatpush.msra.mxu0 %v204
    %1086 = vmatpush.msra.mxu0 %v202
    %1087 = vmatmul.f32.gmra.mxu0 %v1069
    %v1088 = vpop.f32.mrf.mxu0
    %v1089 = vadd.f32 0.0, %v1088
    %1090 = vdwg.mxu0
    %1091 = vmatpush.msra.mxu0 0.0
    %1092 = vmatpush.msra.mxu0 0.0
    %1093 = vmatpush.msra.mxu0 0.0
    %1094 = vmatpush.msra.mxu0 0.0
    %1095 = vmatpush.msra.mxu0 0.0
    %1096 = vmatpush.msra.mxu0 0.0
    %1097 = vmatpush.msra.mxu0 0.0
    %1098 = vmatpush.msra.mxu0 0.0
    %1099 = vmatpush.msra.mxu0 %v217
    %1100 = vmatpush.msra.mxu0 %v215
    %1101 = vmatpush.msra.mxu0 %v213
    %1102 = vmatpush.msra.mxu0 %v211
    %1103 = vmatpush.msra.mxu0 %v209
    %1104 = vmatpush.msra.mxu0 %v207
    %1105 = vmatpush.msra.mxu0 %v205
    %1106 = vmatpush.msra.mxu0 %v203
    %1107 = vmatmul.f32.gmra.mxu0 %v1069
    %v1108 = vpop.f32.mrf.mxu0
    %v1109 = vadd.f32 0.0, %v1108
    %1110 = vdwg.mxu0
    %v1111 = vadd.f32 %v1089, %v312
    %v1112 = vxor.u32 %v1111, 2147483648
    %v1113 = vmul.f32 %v1112, 1.442695
    %v1114 = vpow.pop %v1113
    %v1115 = vadd.f32 %v1114, 1.0
    %v1116 = vrcp.pop %v1115
    %v1117 = vmul.f32 %v1115, %v1116
    %v1118 = vsub.f32 1.0, %v1117
    %v1119 = vmul.f32 %v1116, %v1118
    %v1120 = vadd.f32 %v1116, %v1119
    %vm1121 = vweird.f32 %v1115
    %vm1122 = vweird.f32 %v1116
    %vm1123 = vmor %vm1121, %vm1122
    %v1124 = vsel %vm1123, %v1116, %v1120
    %v1125 = vand.u32 2147483647, %v1115
    %vm1126 = vcmp.eq.f32.partialorder %v1125, 8.507059e+37
    %v1127 = vand.u32 %v1115, 2147483648
    %v1128 = vor.u32 1.1754944e-38, %v1127
    %v1129 = vsel %vm1126, %v1128, %v1124
    %v1130 = vmul.f32 1.0, %v1129
    %v1131 = vtanh.pop %v1111
    %v1132 = vmul.f32 %v1130, %v1009
    %1134 = vrot.lane.b32.xlu0 %v1131, 32
    %v1135 = vpop.permute.xlu0 %1134
    %v1137 = vmul.f32 %v1130, %v1135
    %1139 = vrot.lane.b32.xlu0 %v1137, 32
    %v1140 = vpop.permute.xlu0 %1139
    %v1142 = vadd.f32 %v1132, %v1140
    %v1143 = vtanh.pop %v1142
    %1145 = vrot.lane.b32.xlu0 %v1143, 32
    %v1146 = vpop.permute.xlu0 %1145
    %v1148 = vmul.f32 %v1130, %v1146
    %v1149 = vrot.slane %v197, 7
    %v1151 = vrot.slane %v200, 6
    %v1153 = vsel %vm222, %v1149, %v1151
    %v1154 = vadd.f32 %v1153, %v1109
    %v1155 = vxor.u32 %v1154, 2147483648
    %v1156 = vmul.f32 %v1155, 1.442695
    %v1157 = vpow.pop %v1156
    %v1158 = vadd.f32 %v1157, 1.0
    %v1159 = vrcp.pop %v1158
    %v1160 = vmul.f32 %v1158, %v1159
    %v1161 = vsub.f32 1.0, %v1160
    %v1162 = vmul.f32 %v1159, %v1161
    %v1163 = vadd.f32 %v1159, %v1162
    %vm1164 = vweird.f32 %v1158
    %vm1165 = vweird.f32 %v1159
    %vm1166 = vmor %vm1164, %vm1165
    %v1167 = vsel %vm1166, %v1159, %v1163
    %v1168 = vand.u32 2147483647, %v1158
    %vm1169 = vcmp.eq.f32.partialorder %v1168, 8.507059e+37
    %v1170 = vand.u32 %v1158, 2147483648
    %v1171 = vor.u32 1.1754944e-38, %v1170
    %v1172 = vsel %vm1169, %v1171, %v1167
    %v1173 = vmul.f32 1.0, %v1172
    %v1174 = vtanh.pop %v1154
    %v1175 = vmul.f32 %v1173, %v1052
    %1177 = vrot.lane.b32.xlu0 %v1174, 32
    %v1178 = vpop.permute.xlu0 %1177
    %v1180 = vmul.f32 %v1173, %v1178
    %1182 = vrot.lane.b32.xlu0 %v1180, 32
    %v1183 = vpop.permute.xlu0 %1182
    %v1185 = vadd.f32 %v1175, %v1183
    %v1186 = vtanh.pop %v1185
    %1188 = vrot.lane.b32.xlu0 %v1186, 32
    %v1189 = vpop.permute.xlu0 %1188
    %v1191 = vmul.f32 %v1173, %v1189
    %1193 = vrot.lane.b32.xlu0 %v1191, 64
    %v1194 = vpop.permute.xlu0 %1193
    %1197 = vrot.lane.b32.xlu0 %v1148, 96
    %v1198 = vpop.permute.xlu0 %1197
    %v1200 = vsel %vm172, %v1194, %v1198
    %v1202 = vsel %vm267, %v1200, 0
    %1204 = vmatpush.msra.mxu0 0.0
    %1205 = vmatpush.msra.mxu0 0.0
    %1206 = vmatpush.msra.mxu0 0.0
    %1207 = vmatpush.msra.mxu0 0.0
    %1208 = vmatpush.msra.mxu0 0.0
    %1209 = vmatpush.msra.mxu0 0.0
    %1210 = vmatpush.msra.mxu0 0.0
    %1211 = vmatpush.msra.mxu0 0.0
    %1212 = vmatpush.msra.mxu0 %v216
    %1213 = vmatpush.msra.mxu0 %v214
    %1214 = vmatpush.msra.mxu0 %v212
    %1215 = vmatpush.msra.mxu0 %v210
    %1216 = vmatpush.msra.mxu0 %v208
    %1217 = vmatpush.msra.mxu0 %v206
    %1218 = vmatpush.msra.mxu0 %v204
    %1219 = vmatpush.msra.mxu0 %v202
    %1220 = vmatmul.f32.gmra.mxu0 %v1202
    %v1221 = vpop.f32.mrf.mxu0
    %v1222 = vadd.f32 0.0, %v1221
    %1223 = vdwg.mxu0
    %v1224 = vadd.f32 %v1222, %v312
    %v1225 = vxor.u32 %v1224, 2147483648
    %v1226 = vmul.f32 %v1225, 1.442695
    %v1227 = vpow.pop %v1226
    %v1228 = vadd.f32 %v1227, 1.0
    %v1229 = vrcp.pop %v1228
    %v1230 = vmul.f32 %v1228, %v1229
    %v1231 = vsub.f32 1.0, %v1230
    %v1232 = vmul.f32 %v1229, %v1231
    %v1233 = vadd.f32 %v1229, %v1232
    %vm1234 = vweird.f32 %v1228
    %vm1235 = vweird.f32 %v1229
    %vm1236 = vmor %vm1234, %vm1235
    %v1237 = vsel %vm1236, %v1229, %v1233
    %v1238 = vand.u32 2147483647, %v1228
    %vm1239 = vcmp.eq.f32.partialorder %v1238, 8.507059e+37
    %v1240 = vand.u32 %v1228, 2147483648
    %v1241 = vor.u32 1.1754944e-38, %v1240
    %v1242 = vsel %vm1239, %v1241, %v1237
    %v1243 = vmul.f32 1.0, %v1242
    %v1244 = vtanh.pop %v1224
    %v1245 = vmul.f32 %v1243, %v1142
    %1247 = vrot.lane.b32.xlu0 %v1244, 32
    %v1248 = vpop.permute.xlu0 %1247
    %v1250 = vmul.f32 %v1243, %v1248
    %1252 = vrot.lane.b32.xlu0 %v1250, 32
    %v1253 = vpop.permute.xlu0 %1252
    %v1255 = vadd.f32 %v1245, %v1253
    %v1256 = vtanh.pop %v1255
    %1258 = vrot.lane.b32.xlu0 %v1256, 32
    %v1259 = vpop.permute.xlu0 %1258
    %v1261 = vmul.f32 %v1243, %v1259
    %1262 = vrot.lane.b32.xlu0 %v351, 64
    %v1263 = vpop.permute.xlu0 %1262
    %1265 = vrot.lane.b32.xlu0 %v749, 32
    %v1266 = vpop.permute.xlu0 %1265
    %1268 = vrot.lane.b32.xlu0 %v882, 64
    %v1269 = vpop.permute.xlu0 %1268
    %1272 = vrot.lane.b32.xlu0 %v1261, 32
    %v1273 = vpop.permute.xlu0 %1272
    %v1275 = vsel %vm172, %v1263, %v533
    %v1276 = vsel %vm267, %v1275, %v616
    %vm1277 = vcmask 785408
    %v1278 = vsel %vm1277, %v1276, %v1266
    %v1279 = vsel %vm172, %v1269, %v1065
    %v1280 = vsel %vm267, %v1279, %v1148
    %v1281 = vsel %vm1277, %v1280, %v1273
    %v1282 = vld [vmem:[#allocation10] sm:$0xff]
    %v1283 = vld [vmem:[#allocation10 + $0x8] sm:$0xff]
    %v1284 = vld [vmem:[#allocation10 + $0x10] sm:$0xff]
    %v1285 = vld [vmem:[#allocation10 + $0x18] sm:$0xff]
    %v1286 = vld [vmem:[#allocation10 + $0x20] sm:$0xff]
    %v1287 = vld [vmem:[#allocation10 + $0x28] sm:$0xff]
    %v1288 = vld [vmem:[#allocation10 + $0x30] sm:$0xff]
    %v1289 = vld [vmem:[#allocation10 + $0x38] sm:$0xff]
    %v1290 = vld [vmem:[#allocation10 + $0x40] sm:$0xff]
    %v1291 = vld [vmem:[#allocation10 + $0x48] sm:$0xff]
    %v1292 = vld [vmem:[#allocation10 + $0x50] sm:$0xff]
    %v1293 = vld [vmem:[#allocation10 + $0x58] sm:$0xff]
    %v1294 = vld [vmem:[#allocation10 + $0x60] sm:$0xff]
    %v1295 = vld [vmem:[#allocation10 + $0x68] sm:$0xff]
    %v1296 = vld [vmem:[#allocation10 + $0x70] sm:$0xff]
    %v1297 = vld [vmem:[#allocation10 + $0x78] sm:$0xff]
    %v1298 = vld [vmem:[#allocation10 + $0x80] sm:$0xff]
    %v1299 = vld [vmem:[#allocation10 + $0x88] sm:$0xff]
    %v1300 = vld [vmem:[#allocation10 + $0x90] sm:$0xff]
    %v1301 = vld [vmem:[#allocation10 + $0x98] sm:$0xff]
    %v1302 = vld [vmem:[#allocation10 + $0xa0] sm:$0xff]
    %v1303 = vld [vmem:[#allocation10 + $0xa8] sm:$0xff]
    %v1304 = vld [vmem:[#allocation10 + $0xb0] sm:$0xff]
    %v1305 = vld [vmem:[#allocation10 + $0xb8] sm:$0xff]
    %v1306 = vld [vmem:[#allocation10 + $0xc0] sm:$0xff]
    %v1307 = vld [vmem:[#allocation10 + $0xc8] sm:$0xff]
    %v1308 = vld [vmem:[#allocation10 + $0xd0] sm:$0xff]
    %v1309 = vld [vmem:[#allocation10 + $0xd8] sm:$0xff]
    %v1310 = vld [vmem:[#allocation10 + $0xe0] sm:$0xff]
    %v1311 = vld [vmem:[#allocation10 + $0xe8] sm:$0xff]
    %v1312 = vld [vmem:[#allocation10 + $0xf0] sm:$0xff]
    %v1313 = vld [vmem:[#allocation10 + $0xf8] sm:$0xff]
    %v1314 = vld [vmem:[%s8] sm:$0x1]
    %v1316 = vperm.slane %v1314, 0
    %1318 = vmatpush.msra.mxu0 %v1297
    %1319 = vmatpush.msra.mxu0 %v1296
    %1320 = vmatpush.msra.mxu0 %v1295
    %1321 = vmatpush.msra.mxu0 %v1294
    %1322 = vmatpush.msra.mxu0 %v1293
    %1323 = vmatpush.msra.mxu0 %v1292
    %1324 = vmatpush.msra.mxu0 %v1291
    %1325 = vmatpush.msra.mxu0 %v1290
    %1326 = vmatpush.msra.mxu0 %v1289
    %1327 = vmatpush.msra.mxu0 %v1288
    %1328 = vmatpush.msra.mxu0 %v1287
    %1329 = vmatpush.msra.mxu0 %v1286
    %1330 = vmatpush.msra.mxu0 %v1285
    %1331 = vmatpush.msra.mxu0 %v1284
    %1332 = vmatpush.msra.mxu0 %v1283
    %1333 = vmatpush.msra.mxu0 %v1282
    %1334 = vmatmul.f32.gmra.mxu0 %v1278
    %v1335 = vpop.f32.mrf.mxu0
    %v1336 = vadd.f32 %v1316, %v1335
    %1337 = vdwg.mxu0
    %1338 = vmatpush.msra.mxu0 %v1313
    %1339 = vmatpush.msra.mxu0 %v1312
    %1340 = vmatpush.msra.mxu0 %v1311
    %1341 = vmatpush.msra.mxu0 %v1310
    %1342 = vmatpush.msra.mxu0 %v1309
    %1343 = vmatpush.msra.mxu0 %v1308
    %1344 = vmatpush.msra.mxu0 %v1307
    %1345 = vmatpush.msra.mxu0 %v1306
    %1346 = vmatpush.msra.mxu0 %v1305
    %1347 = vmatpush.msra.mxu0 %v1304
    %1348 = vmatpush.msra.mxu0 %v1303
    %1349 = vmatpush.msra.mxu0 %v1302
    %1350 = vmatpush.msra.mxu0 %v1301
    %1351 = vmatpush.msra.mxu0 %v1300
    %1352 = vmatpush.msra.mxu0 %v1299
    %1353 = vmatpush.msra.mxu0 %v1298
    %1354 = vmatmul.f32.gmra.mxu0 %v1281
    %v1355 = vpop.f32.mrf.mxu0
    %v1356 = vadd.f32 %v1336, %v1355
    %1357 = vdwg.mxu0
    %v1358 = vxor.u32 %v1356, 2147483648
    %v1359 = vmul.f32 %v1358, 1.442695
    %v1360 = vpow.pop %v1359
    %v1361 = vadd.f32 %v1360, 1.0
    %v1362 = vrcp.pop %v1361
    %v1363 = vmul.f32 %v1361, %v1362
    %v1364 = vsub.f32 1.0, %v1363
    %v1365 = vmul.f32 %v1362, %v1364
    %v1366 = vadd.f32 %v1362, %v1365
    %vm1367 = vweird.f32 %v1361
    %vm1368 = vweird.f32 %v1362
    %vm1369 = vmor %vm1367, %vm1368
    %v1370 = vsel %vm1369, %v1362, %v1366
    %v1371 = vand.u32 2147483647, %v1361
    %vm1372 = vcmp.eq.f32.partialorder %v1371, 8.507059e+37
    %v1373 = vand.u32 %v1361, 2147483648
    %v1374 = vor.u32 1.1754944e-38, %v1373
    %v1375 = vsel %vm1372, %v1374, %v1370
    %v1376 = vmul.f32 1.0, %v1375
    %1377 = vst [vmem:[%s9] sm:$0x3] %v1376
    // Predicated region
    $region62: #{generator_batch_forward.1} parent=1 // pred_check
      _
    $region63: #{generator_batch_forward.1} parent=1 // pred_check_branch
      %1379 = sbr.rel (0) target = $region65
    $region64: #{generator_batch_forward.1} parent=1 // pred_region
      _
    $region65: #{generator_batch_forward.1} parent=1 // pred_fallthru
      _
    // Predicated region
    $region66: #{generator_batch_forward.1} parent=1 // pred_check
      _
    $region67: #{generator_batch_forward.1} parent=1 // pred_check_branch
      %1381 = sbr.rel (0) target = $region69
    $region68: #{generator_batch_forward.1} parent=1 // pred_region
      _
    $region69: #{generator_batch_forward.1} parent=1 // pred_fallthru
      _
    %1382 = vsyncpa [#allocation3], 1
    %1383 = vsyncpa [#allocation5], 1
    %1384 = vsyncpa [#allocation8], 1
    %1385 = vsyncpa [#allocation11], 1

</llo_original>
